<compile_context>
chip_gen: v5e
topology: v5e:2x2
jax: 0.10.0
libtpu: 0.0.40
codegen_flags: <defaults>
</compile_context>

<pallas_src>
import functools
import numpy as np
import jax
import jax.numpy as jnp
from jax.experimental import pallas as pl
from jax.experimental.pallas import tpu as pltpu

INV_SQRT2 = 0.7071067811865476
N_AMPS = 16          # 4-qubit statevector
LANES = 128          # strip width on the lane (batch) axis


# ----------------------------------------------------------------------------
# Pallas kernel
# ----------------------------------------------------------------------------
def fidelity_kernel(cs_ref, out_ref, *, action_list):
    f32 = jnp.float32
    spt = cs_ref.shape[0]                      # 128-lane strips per grid tile

    # ---- hoisted per-wire constants on (16, 128) amplitude-x-lane slabs ----
    amp = jax.lax.broadcasted_iota(jnp.int32, (N_AMPS, LANES), 0)
    init_re = (amp == 0).astype(f32)           # |0000> in every batch lane
    ctrl, sgn = [], []
    for j in range(4):
        bit = (amp >> j) & 1
        ctrl.append(bit == 1)                  # wire-j bit set
        sgn.append((2 * bit - 1).astype(f32))  # +1 where set, -1 otherwise

    def flip(x, j):
        """x[k] -> x[k ^ (1<<j)] along the 16-amplitude sublane axis."""
        step = 1 << j
        if step == N_AMPS // 2:                # k ^ 8 == (k +/- 8) mod 16: one roll suffices
            return pltpu.roll(x, shift=step, axis=0)
        # pltpu.roll follows np.roll: roll(x, s)[k] = x[(k - s) % 16], and
        # k ^ step == k - step exactly where bit j of k is set, so ctrl[j] selects
        # between the two rolls (same mask vreg reused by the re and im flips).
        return jnp.where(ctrl[j],
                         pltpu.roll(x, shift=step, axis=0),
                         pltpu.roll(x, shift=N_AMPS - step, axis=0))

    def evolve(c_rows, s_rows):
        """psi = U(angles)|0000>; im tracked as None while it is exactly zero."""
        re, im = init_re, None
        for action in action_list:
            if action == 0:                    # Identity
                continue
            for j in range(4):
                if action == 1:                # Hadamard (real gate)
                    re = INV_SQRT2 * (flip(re, j) - sgn[j] * re)
                    if im is not None:
                        im = INV_SQRT2 * (flip(im, j) - sgn[j] * im)
                elif action == 5:              # CNOT(control=j, target=(j+1)%4) (real gate)
                    t = (j + 1) % 4
                    re = jnp.where(ctrl[j], flip(re, t), re)
                    if im is not None:
                        im = jnp.where(ctrl[j], flip(im, t), im)
                else:                          # RX / RY / RZ
                    # per-gate hoist: one sublane broadcast (and one sign-fold) shared
                    # by the re and im updates of this gate
                    cb = jnp.broadcast_to(c_rows[j:j + 1, :], (N_AMPS, LANES))
                    sb = jnp.broadcast_to(s_rows[j:j + 1, :], (N_AMPS, LANES))
                    if action == 2:            # RX: c*psi - i*s*(X psi)
                        rf = flip(re, j)
                        if im is None:
                            re, im = cb * re, -sb * rf
                        else:
                            imf = flip(im, j)
                            re, im = cb * re + sb * imf, cb * im - sb * rf
                    elif action == 3:          # RY: real rotation
                        ssg = sgn[j] * sb
                        if im is None:
                            re = cb * re + ssg * flip(re, j)
                        else:
                            re, im = (cb * re + ssg * flip(re, j),
                                      cb * im + ssg * flip(im, j))
                    elif action == 4:          # RZ: multiply by (c + i*sgn*s)
                        ssg = sgn[j] * sb
                        if im is None:
                            re, im = cb * re, ssg * re
                        else:
                            re, im = cb * re - ssg * im, cb * im + ssg * re
                    else:
                        raise ValueError(f"unknown action {action}")
        if im is None:
            im = jnp.zeros((N_AMPS, LANES), f32)
        return re, im

    def fidelity_strip(blk):                   # blk: (16, 128) packed cos/sin rows
        re1, im1 = evolve(blk[0:4, :], blk[4:8, :])
        re2, im2 = evolve(blk[8:12, :], blk[12:16, :])
        # fidelity = |<psi2|psi1>|^2, reduced over the 16 amplitudes (sublane axis)
        dot_re = jnp.sum(re2 * re1 + im2 * im1, axis=0, keepdims=True)
        dot_im = jnp.sum(re2 * im1 - im2 * re1, axis=0, keepdims=True)
        return dot_re * dot_re + dot_im * dot_im            # (1, 128)

    if spt == 1:
        out_ref[0] = fidelity_strip(cs_ref[0])
    else:
        # scf.for over 128-lane strips: the grid-step overhead is paid once per big tile
        # while per-iteration live statevector slabs stay at ~2 vregs each (no spills).
        @pl.loop(0, spt)
        def _(i):
            out_ref[i] = fidelity_strip(cs_ref[i])


# ----------------------------------------------------------------------------
# Wrapper: MLP + cos/sin in XLA, lane-dense strip layout, pallas_call plumbing
# ----------------------------------------------------------------------------
def _pick_tile_strips(batch, tile_b):
    """128-lane strips per grid tile; keep >=2 grid steps when the batch allows (v7x: 2 TCs)."""
    total = max(1, -(-batch // LANES))
    spt = max(1, tile_b // LANES)
    if total >= 2:
        spt = min(spt, -(-total // 2))
    return min(spt, total)


def model_fidelity_forward(x1, x2, params, action_list, *, tile_b=512):
    f32 = jnp.float32
    B = x1.shape[0]

    # tiny shared MLP + half-angle cos/sin in plain XLA (review: keep MXU-unfriendly
    # K=4/8 matmuls and the 8 transcendentals per element out of the kernel)
    def mlp(x):
        h = jnp.maximum(x @ params["w1"].T + params["b1"][:, 0], 0.0)
        h = jnp.maximum(h @ params["w2"].T + params["b2"][:, 0], 0.0)
        return h @ params["w3"].T + params["b3"][:, 0]

    h1 = 0.5 * mlp(x1.astype(f32))
    h2 = 0.5 * mlp(x2.astype(f32))
    cs = jnp.concatenate([jnp.cos(h1), jnp.sin(h1), jnp.cos(h2), jnp.sin(h2)], axis=1)  # (B,16)

    # lane-dense strip layout: (strips, 16 coefficient rows, 128 batch lanes)
    spt = _pick_tile_strips(B, tile_b)
    total = max(1, -(-B // LANES))
    n_blocks = -(-total // spt)
    s_pad = n_blocks * spt
    b_pad = s_pad * LANES
    cs = jnp.pad(cs, ((0, b_pad - B), (0, 0)))                    # zero pad -> harmless lanes
    cs = cs.reshape(s_pad, LANES, N_AMPS).transpose(0, 2, 1)      # (s_pad, 16, 128)

    kernel = functools.partial(fidelity_kernel,
                               action_list=tuple(int(a) for a in action_list))

    n_gates = 2 * 4 * sum(1 for a in action_list if int(a) != 0)
    cost = pl.CostEstimate(
        flops=int(b_pad * (n_gates * N_AMPS * 6 + N_AMPS * 8)),
        transcendentals=0,
        bytes_accessed=int(b_pad * (N_AMPS * 4 + 4)),
    )

    out = pl.pallas_call(
        kernel,
        grid_spec=pltpu.PrefetchScalarGridSpec(
            num_scalar_prefetch=0,
            grid=(n_blocks,),
            in_specs=[pl.BlockSpec((spt, N_AMPS, LANES), lambda i: (i, 0, 0))],
            out_specs=pl.BlockSpec((spt, 1, LANES), lambda i: (i, 0, 0)),
        ),
        out_shape=jax.ShapeDtypeStruct((s_pad, 1, LANES), f32),
        compiler_params=pltpu.CompilerParams(dimension_semantics=("parallel",)),
        cost_estimate=cost,
    )(cs)

    return out.reshape(b_pad)[:B]              # probs[:, 0] of the original module


def init_params(key):
    ks = jax.random.split(key, 6)

    def lin(kw, kb, fan_in, fan_out):
        bound = 1.0 / np.sqrt(fan_in)
        w = jax.random.uniform(kw, (fan_out, fan_in), jnp.float32, -bound, bound)
        b = jax.random.uniform(kb, (fan_out, 1), jnp.float32, -bound, bound)
        return w, b

    w1, b1 = lin(ks[0], ks[1], 4, 8)
    w2, b2 = lin(ks[2], ks[3], 8, 8)
    w3, b3 = lin(ks[4], ks[5], 8, 4)
    return {"w1": w1, "b1": b1, "w2": w2, "b2": b2, "w3": w3, "b3": b3}


# ----------------------------------------------------------------------------
# Pure numpy reference (explicit adjoint circuit, complex statevector)
# ----------------------------------------------------------------------------
def _ref_apply_1q(psi, U, wire):
    psi = np.tensordot(U, psi, axes=([1], [wire]))
    return np.moveaxis(psi, 0, wire)


def _ref_apply_cnot(psi, c, t):
    psi = np.moveaxis(psi, [c, t], [0, 1])
    shp = psi.shape
    cn = np.array([[1, 0, 0, 0], [0, 1, 0, 0], [0, 0, 0, 1], [0, 0, 1, 0]], np.complex128)
    psi = (cn @ psi.reshape(4, -1)).reshape(shp)
    return np.moveaxis(psi, [0, 1], [c, t])


def _ref_gate(action, theta):
    c, s = np.cos(theta / 2.0), np.sin(theta / 2.0)
    if action == 1:
        return np.array([[1, 1], [1, -1]], np.complex128) * INV_SQRT2
    if action == 2:
        return np.array([[c, -1j * s], [-1j * s, c]], np.complex128)
    if action == 3:
        return np.array([[c, -s], [s, c]], np.complex128)
    if action == 4:
        return np.array([[np.exp(-0.5j * theta), 0], [0, np.exp(0.5j * theta)]], np.complex128)
    raise ValueError(action)


def _ref_embed(psi, action_list, angles, adjoint):
    ops = [(a, j) for a in action_list for j in range(4)]
    if adjoint:
        ops = ops[::-1]
    for action, j in ops:
        if action == 0:
            continue
        if action == 5:
            psi = _ref_apply_cnot(psi, j, (j + 1) % 4)
            continue
        theta = float(angles[j])
        if adjoint and action in (2, 3, 4):
            theta = -theta
        psi = _ref_apply_1q(psi, _ref_gate(action, theta), j)
    return psi


def reference_forward(x1, x2, params, action_list):
    w1 = np.asarray(params["w1"]); b1 = np.asarray(params["b1"])[:, 0]
    w2 = np.asarray(params["w2"]); b2 = np.asarray(params["b2"])[:, 0]
    w3 = np.asarray(params["w3"]); b3 = np.asarray(params["b3"])[:, 0]

    def mlp(x):
        h = np.maximum(x @ w1.T + b1, 0.0)
        h = np.maximum(h @ w2.T + b2, 0.0)
        return h @ w3.T + b3

    a1 = mlp(np.asarray(x1, np.float64))
    a2 = mlp(np.asarray(x2, np.float64))
    out = []
    for b in range(x1.shape[0]):
        psi = np.zeros((2, 2, 2, 2), np.complex128)
        psi[0, 0, 0, 0] = 1.0
        psi = _ref_embed(psi, action_list, a1[b], adjoint=False)
        psi = _ref_embed(psi, action_list, a2[b], adjoint=True)
        out.append(abs(psi[0, 0, 0, 0]) ** 2)
    return np.array(out, np.float32)


if __name__ == "__main__":
    # action codes: 0=I, 1=H, 2=RX, 3=RY, 4=RZ, 5=CNOT — exercise all of them
    action_list = (0, 3, 1, 5, 2, 4)

    key = jax.random.PRNGKey(0)
    kx1, kx2, kp = jax.random.split(key, 3)
    params = init_params(kp)

    # small demo batch (single-strip / single-grid-step path)
    B = 8
    x1 = jax.random.normal(kx1, (B, 4), jnp.float32)
    x2 = jax.random.normal(kx2, (B, 4), jnp.float32)
    out = jax.block_until_ready(model_fidelity_forward(x1, x2, params, action_list))
    ref = reference_forward(x1, x2, params, action_list)
    np.testing.assert_allclose(np.asarray(out), ref, atol=5e-5, rtol=1e-3)
    assert np.all((np.asarray(out) >= -1e-6) & (np.asarray(out) <= 1.0 + 1e-6))

    # larger batch exercising the multi-strip in-kernel loop + 2-step parallel grid
    B2 = 300
    kx3, kx4 = jax.random.split(kx1)
    y1 = jax.random.normal(kx3, (B2, 4), jnp.float32)
    y2 = jax.random.normal(kx4, (B2, 4), jnp.float32)
    out2 = jax.block_until_ready(model_fidelity_forward(y1, y2, params, action_list))
    ref2 = reference_forward(y1, y2, params, action_list)
    np.testing.assert_allclose(np.asarray(out2), ref2, atol=5e-5, rtol=1e-3)

    print("KERNEL_OK")
</pallas_src>

<mosaic_0001>
module attributes {stable_mosaic.version = 11 : i64} {
  func.func @fidelity_kernel(%arg0: i32, %arg1: memref<1x16x128xf32, #tpu.memory_space<vmem>>, %arg2: memref<1x1x128xf32, #tpu.memory_space<vmem>>) attributes {dimension_semantics = [#tpu.dimension_semantics<parallel>], iteration_bounds = array<i64: 1>, scalar_prefetch = 0 : i64, scratch_operands = 0 : i64, tpu.core_type = #tpu.core_type<tc>, window_params = [{transform_indices = @transform_0, window_bounds = array<i64: 1, 16, 128>}, {transform_indices = @transform_1, window_bounds = array<i64: 1, 1, 128>}]} {
    %0 = tpu.iota {dimensions = array<i32: 0>} : vector<16x128xi32>
    %c0_i32 = arith.constant 0 : i32
    %1 = vector.broadcast %c0_i32 : i32 to vector<16x128xi32>
    %2 = arith.cmpi eq, %0, %1 : vector<16x128xi32>
    %3 = arith.extui %2 : vector<16x128xi1> to vector<16x128xi32>
    %4 = arith.sitofp %3 : vector<16x128xi32> to vector<16x128xf32>
    %c0_i32_0 = arith.constant 0 : i32
    %5 = vector.broadcast %c0_i32_0 : i32 to vector<16x128xi32>
    %6 = arith.shrsi %0, %5 : vector<16x128xi32>
    %c1_i32 = arith.constant 1 : i32
    %7 = vector.broadcast %c1_i32 : i32 to vector<16x128xi32>
    %8 = arith.andi %6, %7 : vector<16x128xi32>
    %c1_i32_1 = arith.constant 1 : i32
    %9 = vector.broadcast %c1_i32_1 : i32 to vector<16x128xi32>
    %10 = arith.cmpi eq, %8, %9 : vector<16x128xi32>
    %c2_i32 = arith.constant 2 : i32
    %11 = vector.broadcast %c2_i32 : i32 to vector<16x128xi32>
    %12 = arith.muli %11, %8 : vector<16x128xi32>
    %c1_i32_2 = arith.constant 1 : i32
    %13 = vector.broadcast %c1_i32_2 : i32 to vector<16x128xi32>
    %14 = arith.subi %12, %13 : vector<16x128xi32>
    %15 = arith.sitofp %14 : vector<16x128xi32> to vector<16x128xf32>
    %c1_i32_3 = arith.constant 1 : i32
    %16 = vector.broadcast %c1_i32_3 : i32 to vector<16x128xi32>
    %17 = arith.shrsi %0, %16 : vector<16x128xi32>
    %c1_i32_4 = arith.constant 1 : i32
    %18 = vector.broadcast %c1_i32_4 : i32 to vector<16x128xi32>
    %19 = arith.andi %17, %18 : vector<16x128xi32>
    %c1_i32_5 = arith.constant 1 : i32
    %20 = vector.broadcast %c1_i32_5 : i32 to vector<16x128xi32>
    %21 = arith.cmpi eq, %19, %20 : vector<16x128xi32>
    %c2_i32_6 = arith.constant 2 : i32
    %22 = vector.broadcast %c2_i32_6 : i32 to vector<16x128xi32>
    %23 = arith.muli %22, %19 : vector<16x128xi32>
    %c1_i32_7 = arith.constant 1 : i32
    %24 = vector.broadcast %c1_i32_7 : i32 to vector<16x128xi32>
    %25 = arith.subi %23, %24 : vector<16x128xi32>
    %26 = arith.sitofp %25 : vector<16x128xi32> to vector<16x128xf32>
    %c2_i32_8 = arith.constant 2 : i32
    %27 = vector.broadcast %c2_i32_8 : i32 to vector<16x128xi32>
    %28 = arith.shrsi %0, %27 : vector<16x128xi32>
    %c1_i32_9 = arith.constant 1 : i32
    %29 = vector.broadcast %c1_i32_9 : i32 to vector<16x128xi32>
    %30 = arith.andi %28, %29 : vector<16x128xi32>
    %c1_i32_10 = arith.constant 1 : i32
    %31 = vector.broadcast %c1_i32_10 : i32 to vector<16x128xi32>
    %32 = arith.cmpi eq, %30, %31 : vector<16x128xi32>
    %c2_i32_11 = arith.constant 2 : i32
    %33 = vector.broadcast %c2_i32_11 : i32 to vector<16x128xi32>
    %34 = arith.muli %33, %30 : vector<16x128xi32>
    %c1_i32_12 = arith.constant 1 : i32
    %35 = vector.broadcast %c1_i32_12 : i32 to vector<16x128xi32>
    %36 = arith.subi %34, %35 : vector<16x128xi32>
    %37 = arith.sitofp %36 : vector<16x128xi32> to vector<16x128xf32>
    %c3_i32 = arith.constant 3 : i32
    %38 = vector.broadcast %c3_i32 : i32 to vector<16x128xi32>
    %39 = arith.shrsi %0, %38 : vector<16x128xi32>
    %c1_i32_13 = arith.constant 1 : i32
    %40 = vector.broadcast %c1_i32_13 : i32 to vector<16x128xi32>
    %41 = arith.andi %39, %40 : vector<16x128xi32>
    %c1_i32_14 = arith.constant 1 : i32
    %42 = vector.broadcast %c1_i32_14 : i32 to vector<16x128xi32>
    %43 = arith.cmpi eq, %41, %42 : vector<16x128xi32>
    %c2_i32_15 = arith.constant 2 : i32
    %44 = vector.broadcast %c2_i32_15 : i32 to vector<16x128xi32>
    %45 = arith.muli %44, %41 : vector<16x128xi32>
    %c1_i32_16 = arith.constant 1 : i32
    %46 = vector.broadcast %c1_i32_16 : i32 to vector<16x128xi32>
    %47 = arith.subi %45, %46 : vector<16x128xi32>
    %48 = arith.sitofp %47 : vector<16x128xi32> to vector<16x128xf32>
    %c0 = arith.constant 0 : index
    %c0_17 = arith.constant 0 : index
    %c0_18 = arith.constant 0 : index
    %49 = vector.load %arg1[%c0, %c0_17, %c0_18] : memref<1x16x128xf32, #tpu.memory_space<vmem>>, vector<1x16x128xf32>
    %50 = vector.shape_cast %49 : vector<1x16x128xf32> to vector<16x128xf32>
    %51 = vector.extract_strided_slice %50 {offsets = [0, 0], sizes = [4, 128], strides = [1, 1]} : vector<16x128xf32> to vector<4x128xf32>
    %52 = vector.extract_strided_slice %50 {offsets = [4, 0], sizes = [4, 128], strides = [1, 1]} : vector<16x128xf32> to vector<4x128xf32>
    %53 = vector.extract_strided_slice %51 {offsets = [0, 0], sizes = [1, 128], strides = [1, 1]} : vector<4x128xf32> to vector<1x128xf32>
    %54 = vector.shape_cast %53 : vector<1x128xf32> to vector<1x128xf32>
    %55 = vector.broadcast %54 : vector<1x128xf32> to vector<16x128xf32>
    %56 = vector.extract_strided_slice %52 {offsets = [0, 0], sizes = [1, 128], strides = [1, 1]} : vector<4x128xf32> to vector<1x128xf32>
    %57 = vector.shape_cast %56 : vector<1x128xf32> to vector<1x128xf32>
    %58 = vector.broadcast %57 : vector<1x128xf32> to vector<16x128xf32>
    %59 = arith.mulf %15, %58 : vector<16x128xf32>
    %60 = arith.mulf %55, %4 : vector<16x128xf32>
    %c1_i32_19 = arith.constant 1 : i32
    %61 = tpu.dynamic_rotate %4 by %c1_i32_19 dim 0 : vector<16x128xf32>, i32 -> vector<16x128xf32>
    %c15_i32 = arith.constant 15 : i32
    %62 = tpu.dynamic_rotate %4 by %c15_i32 dim 0 : vector<16x128xf32>, i32 -> vector<16x128xf32>
    %63 = arith.select %10, %61, %62 : vector<16x128xi1>, vector<16x128xf32>
    %64 = arith.mulf %59, %63 : vector<16x128xf32>
    %65 = arith.addf %60, %64 : vector<16x128xf32>
    %66 = vector.extract_strided_slice %51 {offsets = [1, 0], sizes = [1, 128], strides = [1, 1]} : vector<4x128xf32> to vector<1x128xf32>
    %67 = vector.shape_cast %66 : vector<1x128xf32> to vector<1x128xf32>
    %68 = vector.broadcast %67 : vector<1x128xf32> to vector<16x128xf32>
    %69 = vector.extract_strided_slice %52 {offsets = [1, 0], sizes = [1, 128], strides = [1, 1]} : vector<4x128xf32> to vector<1x128xf32>
    %70 = vector.shape_cast %69 : vector<1x128xf32> to vector<1x128xf32>
    %71 = vector.broadcast %70 : vector<1x128xf32> to vector<16x128xf32>
    %72 = arith.mulf %26, %71 : vector<16x128xf32>
    %73 = arith.mulf %68, %65 : vector<16x128xf32>
    %c2_i32_20 = arith.constant 2 : i32
    %74 = tpu.dynamic_rotate %65 by %c2_i32_20 dim 0 : vector<16x128xf32>, i32 -> vector<16x128xf32>
    %c14_i32 = arith.constant 14 : i32
    %75 = tpu.dynamic_rotate %65 by %c14_i32 dim 0 : vector<16x128xf32>, i32 -> vector<16x128xf32>
    %76 = arith.select %21, %74, %75 : vector<16x128xi1>, vector<16x128xf32>
    %77 = arith.mulf %72, %76 : vector<16x128xf32>
    %78 = arith.addf %73, %77 : vector<16x128xf32>
    %79 = vector.extract_strided_slice %51 {offsets = [2, 0], sizes = [1, 128], strides = [1, 1]} : vector<4x128xf32> to vector<1x128xf32>
    %80 = vector.shape_cast %79 : vector<1x128xf32> to vector<1x128xf32>
    %81 = vector.broadcast %80 : vector<1x128xf32> to vector<16x128xf32>
    %82 = vector.extract_strided_slice %52 {offsets = [2, 0], sizes = [1, 128], strides = [1, 1]} : vector<4x128xf32> to vector<1x128xf32>
    %83 = vector.shape_cast %82 : vector<1x128xf32> to vector<1x128xf32>
    %84 = vector.broadcast %83 : vector<1x128xf32> to vector<16x128xf32>
    %85 = arith.mulf %37, %84 : vector<16x128xf32>
    %86 = arith.mulf %81, %78 : vector<16x128xf32>
    %c4_i32 = arith.constant 4 : i32
    %87 = tpu.dynamic_rotate %78 by %c4_i32 dim 0 : vector<16x128xf32>, i32 -> vector<16x128xf32>
    %c12_i32 = arith.constant 12 : i32
    %88 = tpu.dynamic_rotate %78 by %c12_i32 dim 0 : vector<16x128xf32>, i32 -> vector<16x128xf32>
    %89 = arith.select %32, %87, %88 : vector<16x128xi1>, vector<16x128xf32>
    %90 = arith.mulf %85, %89 : vector<16x128xf32>
    %91 = arith.addf %86, %90 : vector<16x128xf32>
    %92 = vector.extract_strided_slice %51 {offsets = [3, 0], sizes = [1, 128], strides = [1, 1]} : vector<4x128xf32> to vector<1x128xf32>
    %93 = vector.shape_cast %92 : vector<1x128xf32> to vector<1x128xf32>
    %94 = vector.broadcast %93 : vector<1x128xf32> to vector<16x128xf32>
    %95 = vector.extract_strided_slice %52 {offsets = [3, 0], sizes = [1, 128], strides = [1, 1]} : vector<4x128xf32> to vector<1x128xf32>
    %96 = vector.shape_cast %95 : vector<1x128xf32> to vector<1x128xf32>
    %97 = vector.broadcast %96 : vector<1x128xf32> to vector<16x128xf32>
    %98 = arith.mulf %48, %97 : vector<16x128xf32>
    %99 = arith.mulf %94, %91 : vector<16x128xf32>
    %c8_i32 = arith.constant 8 : i32
    %100 = tpu.dynamic_rotate %91 by %c8_i32 dim 0 : vector<16x128xf32>, i32 -> vector<16x128xf32>
    %101 = arith.mulf %98, %100 : vector<16x128xf32>
    %102 = arith.addf %99, %101 : vector<16x128xf32>
    %c1_i32_21 = arith.constant 1 : i32
    %103 = tpu.dynamic_rotate %102 by %c1_i32_21 dim 0 : vector<16x128xf32>, i32 -> vector<16x128xf32>
    %c15_i32_22 = arith.constant 15 : i32
    %104 = tpu.dynamic_rotate %102 by %c15_i32_22 dim 0 : vector<16x128xf32>, i32 -> vector<16x128xf32>
    %105 = arith.select %10, %103, %104 : vector<16x128xi1>, vector<16x128xf32>
    %106 = arith.mulf %15, %102 : vector<16x128xf32>
    %107 = arith.subf %105, %106 : vector<16x128xf32>
    %cst = arith.constant 0.707106769 : f32
    %108 = vector.broadcast %cst : f32 to vector<16x128xf32>
    %109 = arith.mulf %108, %107 : vector<16x128xf32>
    %c2_i32_23 = arith.constant 2 : i32
    %110 = tpu.dynamic_rotate %109 by %c2_i32_23 dim 0 : vector<16x128xf32>, i32 -> vector<16x128xf32>
    %c14_i32_24 = arith.constant 14 : i32
    %111 = tpu.dynamic_rotate %109 by %c14_i32_24 dim 0 : vector<16x128xf32>, i32 -> vector<16x128xf32>
    %112 = arith.select %21, %110, %111 : vector<16x128xi1>, vector<16x128xf32>
    %113 = arith.mulf %26, %109 : vector<16x128xf32>
    %114 = arith.subf %112, %113 : vector<16x128xf32>
    %cst_25 = arith.constant 0.707106769 : f32
    %115 = vector.broadcast %cst_25 : f32 to vector<16x128xf32>
    %116 = arith.mulf %115, %114 : vector<16x128xf32>
    %c4_i32_26 = arith.constant 4 : i32
    %117 = tpu.dynamic_rotate %116 by %c4_i32_26 dim 0 : vector<16x128xf32>, i32 -> vector<16x128xf32>
    %c12_i32_27 = arith.constant 12 : i32
    %118 = tpu.dynamic_rotate %116 by %c12_i32_27 dim 0 : vector<16x128xf32>, i32 -> vector<16x128xf32>
    %119 = arith.select %32, %117, %118 : vector<16x128xi1>, vector<16x128xf32>
    %120 = arith.mulf %37, %116 : vector<16x128xf32>
    %121 = arith.subf %119, %120 : vector<16x128xf32>
    %cst_28 = arith.constant 0.707106769 : f32
    %122 = vector.broadcast %cst_28 : f32 to vector<16x128xf32>
    %123 = arith.mulf %122, %121 : vector<16x128xf32>
    %c8_i32_29 = arith.constant 8 : i32
    %124 = tpu.dynamic_rotate %123 by %c8_i32_29 dim 0 : vector<16x128xf32>, i32 -> vector<16x128xf32>
    %125 = arith.mulf %48, %123 : vector<16x128xf32>
    %126 = arith.subf %124, %125 : vector<16x128xf32>
    %cst_30 = arith.constant 0.707106769 : f32
    %127 = vector.broadcast %cst_30 : f32 to vector<16x128xf32>
    %128 = arith.mulf %127, %126 : vector<16x128xf32>
    %c2_i32_31 = arith.constant 2 : i32
    %129 = tpu.dynamic_rotate %128 by %c2_i32_31 dim 0 : vector<16x128xf32>, i32 -> vector<16x128xf32>
    %c14_i32_32 = arith.constant 14 : i32
    %130 = tpu.dynamic_rotate %128 by %c14_i32_32 dim 0 : vector<16x128xf32>, i32 -> vector<16x128xf32>
    %131 = arith.select %21, %129, %130 : vector<16x128xi1>, vector<16x128xf32>
    %132 = arith.select %10, %131, %128 : vector<16x128xi1>, vector<16x128xf32>
    %c4_i32_33 = arith.constant 4 : i32
    %133 = tpu.dynamic_rotate %132 by %c4_i32_33 dim 0 : vector<16x128xf32>, i32 -> vector<16x128xf32>
    %c12_i32_34 = arith.constant 12 : i32
    %134 = tpu.dynamic_rotate %132 by %c12_i32_34 dim 0 : vector<16x128xf32>, i32 -> vector<16x128xf32>
    %135 = arith.select %32, %133, %134 : vector<16x128xi1>, vector<16x128xf32>
    %136 = arith.select %21, %135, %132 : vector<16x128xi1>, vector<16x128xf32>
    %c8_i32_35 = arith.constant 8 : i32
    %137 = tpu.dynamic_rotate %136 by %c8_i32_35 dim 0 : vector<16x128xf32>, i32 -> vector<16x128xf32>
    %138 = arith.select %32, %137, %136 : vector<16x128xi1>, vector<16x128xf32>
    %c1_i32_36 = arith.constant 1 : i32
    %139 = tpu.dynamic_rotate %138 by %c1_i32_36 dim 0 : vector<16x128xf32>, i32 -> vector<16x128xf32>
    %c15_i32_37 = arith.constant 15 : i32
    %140 = tpu.dynamic_rotate %138 by %c15_i32_37 dim 0 : vector<16x128xf32>, i32 -> vector<16x128xf32>
    %141 = arith.select %10, %139, %140 : vector<16x128xi1>, vector<16x128xf32>
    %142 = arith.select %43, %141, %138 : vector<16x128xi1>, vector<16x128xf32>
    %143 = vector.extract_strided_slice %51 {offsets = [0, 0], sizes = [1, 128], strides = [1, 1]} : vector<4x128xf32> to vector<1x128xf32>
    %144 = vector.shape_cast %143 : vector<1x128xf32> to vector<1x128xf32>
    %145 = vector.broadcast %144 : vector<1x128xf32> to vector<16x128xf32>
    %146 = vector.extract_strided_slice %52 {offsets = [0, 0], sizes = [1, 128], strides = [1, 1]} : vector<4x128xf32> to vector<1x128xf32>
    %147 = vector.shape_cast %146 : vector<1x128xf32> to vector<1x128xf32>
    %148 = vector.broadcast %147 : vector<1x128xf32> to vector<16x128xf32>
    %c1_i32_38 = arith.constant 1 : i32
    %149 = tpu.dynamic_rotate %142 by %c1_i32_38 dim 0 : vector<16x128xf32>, i32 -> vector<16x128xf32>
    %c15_i32_39 = arith.constant 15 : i32
    %150 = tpu.dynamic_rotate %142 by %c15_i32_39 dim 0 : vector<16x128xf32>, i32 -> vector<16x128xf32>
    %151 = arith.select %10, %149, %150 : vector<16x128xi1>, vector<16x128xf32>
    %152 = arith.mulf %145, %142 : vector<16x128xf32>
    %cst_40 = arith.constant 0.000000e+00 : f32
    %153 = vector.broadcast %cst_40 : f32 to vector<16x128xf32>
    %154 = arith.subf %153, %148 : vector<16x128xf32>
    %155 = arith.mulf %154, %151 : vector<16x128xf32>
    %156 = vector.extract_strided_slice %51 {offsets = [1, 0], sizes = [1, 128], strides = [1, 1]} : vector<4x128xf32> to vector<1x128xf32>
    %157 = vector.shape_cast %156 : vector<1x128xf32> to vector<1x128xf32>
    %158 = vector.broadcast %157 : vector<1x128xf32> to vector<16x128xf32>
    %159 = vector.extract_strided_slice %52 {offsets = [1, 0], sizes = [1, 128], strides = [1, 1]} : vector<4x128xf32> to vector<1x128xf32>
    %160 = vector.shape_cast %159 : vector<1x128xf32> to vector<1x128xf32>
    %161 = vector.broadcast %160 : vector<1x128xf32> to vector<16x128xf32>
    %c2_i32_41 = arith.constant 2 : i32
    %162 = tpu.dynamic_rotate %152 by %c2_i32_41 dim 0 : vector<16x128xf32>, i32 -> vector<16x128xf32>
    %c14_i32_42 = arith.constant 14 : i32
    %163 = tpu.dynamic_rotate %152 by %c14_i32_42 dim 0 : vector<16x128xf32>, i32 -> vector<16x128xf32>
    %164 = arith.select %21, %162, %163 : vector<16x128xi1>, vector<16x128xf32>
    %c2_i32_43 = arith.constant 2 : i32
    %165 = tpu.dynamic_rotate %155 by %c2_i32_43 dim 0 : vector<16x128xf32>, i32 -> vector<16x128xf32>
    %c14_i32_44 = arith.constant 14 : i32
    %166 = tpu.dynamic_rotate %155 by %c14_i32_44 dim 0 : vector<16x128xf32>, i32 -> vector<16x128xf32>
    %167 = arith.select %21, %165, %166 : vector<16x128xi1>, vector<16x128xf32>
    %168 = arith.mulf %158, %152 : vector<16x128xf32>
    %169 = arith.mulf %161, %167 : vector<16x128xf32>
    %170 = arith.addf %168, %169 : vector<16x128xf32>
    %171 = arith.mulf %158, %155 : vector<16x128xf32>
    %172 = arith.mulf %161, %164 : vector<16x128xf32>
    %173 = arith.subf %171, %172 : vector<16x128xf32>
    %174 = vector.extract_strided_slice %51 {offsets = [2, 0], sizes = [1, 128], strides = [1, 1]} : vector<4x128xf32> to vector<1x128xf32>
    %175 = vector.shape_cast %174 : vector<1x128xf32> to vector<1x128xf32>
    %176 = vector.broadcast %175 : vector<1x128xf32> to vector<16x128xf32>
    %177 = vector.extract_strided_slice %52 {offsets = [2, 0], sizes = [1, 128], strides = [1, 1]} : vector<4x128xf32> to vector<1x128xf32>
    %178 = vector.shape_cast %177 : vector<1x128xf32> to vector<1x128xf32>
    %179 = vector.broadcast %178 : vector<1x128xf32> to vector<16x128xf32>
    %c4_i32_45 = arith.constant 4 : i32
    %180 = tpu.dynamic_rotate %170 by %c4_i32_45 dim 0 : vector<16x128xf32>, i32 -> vector<16x128xf32>
    %c12_i32_46 = arith.constant 12 : i32
    %181 = tpu.dynamic_rotate %170 by %c12_i32_46 dim 0 : vector<16x128xf32>, i32 -> vector<16x128xf32>
    %182 = arith.select %32, %180, %181 : vector<16x128xi1>, vector<16x128xf32>
    %c4_i32_47 = arith.constant 4 : i32
    %183 = tpu.dynamic_rotate %173 by %c4_i32_47 dim 0 : vector<16x128xf32>, i32 -> vector<16x128xf32>
    %c12_i32_48 = arith.constant 12 : i32
    %184 = tpu.dynamic_rotate %173 by %c12_i32_48 dim 0 : vector<16x128xf32>, i32 -> vector<16x128xf32>
    %185 = arith.select %32, %183, %184 : vector<16x128xi1>, vector<16x128xf32>
    %186 = arith.mulf %176, %170 : vector<16x128xf32>
    %187 = arith.mulf %179, %185 : vector<16x128xf32>
    %188 = arith.addf %186, %187 : vector<16x128xf32>
    %189 = arith.mulf %176, %173 : vector<16x128xf32>
    %190 = arith.mulf %179, %182 : vector<16x128xf32>
    %191 = arith.subf %189, %190 : vector<16x128xf32>
    %192 = vector.extract_strided_slice %51 {offsets = [3, 0], sizes = [1, 128], strides = [1, 1]} : vector<4x128xf32> to vector<1x128xf32>
    %193 = vector.shape_cast %192 : vector<1x128xf32> to vector<1x128xf32>
    %194 = vector.broadcast %193 : vector<1x128xf32> to vector<16x128xf32>
    %195 = vector.extract_strided_slice %52 {offsets = [3, 0], sizes = [1, 128], strides = [1, 1]} : vector<4x128xf32> to vector<1x128xf32>
    %196 = vector.shape_cast %195 : vector<1x128xf32> to vector<1x128xf32>
    %197 = vector.broadcast %196 : vector<1x128xf32> to vector<16x128xf32>
    %c8_i32_49 = arith.constant 8 : i32
    %198 = tpu.dynamic_rotate %188 by %c8_i32_49 dim 0 : vector<16x128xf32>, i32 -> vector<16x128xf32>
    %c8_i32_50 = arith.constant 8 : i32
    %199 = tpu.dynamic_rotate %191 by %c8_i32_50 dim 0 : vector<16x128xf32>, i32 -> vector<16x128xf32>
    %200 = arith.mulf %194, %188 : vector<16x128xf32>
    %201 = arith.mulf %197, %199 : vector<16x128xf32>
    %202 = arith.addf %200, %201 : vector<16x128xf32>
    %203 = arith.mulf %194, %191 : vector<16x128xf32>
    %204 = arith.mulf %197, %198 : vector<16x128xf32>
    %205 = arith.subf %203, %204 : vector<16x128xf32>
    %206 = vector.extract_strided_slice %51 {offsets = [0, 0], sizes = [1, 128], strides = [1, 1]} : vector<4x128xf32> to vector<1x128xf32>
    %207 = vector.shape_cast %206 : vector<1x128xf32> to vector<1x128xf32>
    %208 = vector.broadcast %207 : vector<1x128xf32> to vector<16x128xf32>
    %209 = vector.extract_strided_slice %52 {offsets = [0, 0], sizes = [1, 128], strides = [1, 1]} : vector<4x128xf32> to vector<1x128xf32>
    %210 = vector.shape_cast %209 : vector<1x128xf32> to vector<1x128xf32>
    %211 = vector.broadcast %210 : vector<1x128xf32> to vector<16x128xf32>
    %212 = arith.mulf %15, %211 : vector<16x128xf32>
    %213 = arith.mulf %208, %202 : vector<16x128xf32>
    %214 = arith.mulf %212, %205 : vector<16x128xf32>
    %215 = arith.subf %213, %214 : vector<16x128xf32>
    %216 = arith.mulf %208, %205 : vector<16x128xf32>
    %217 = arith.mulf %212, %202 : vector<16x128xf32>
    %218 = arith.addf %216, %217 : vector<16x128xf32>
    %219 = vector.extract_strided_slice %51 {offsets = [1, 0], sizes = [1, 128], strides = [1, 1]} : vector<4x128xf32> to vector<1x128xf32>
    %220 = vector.shape_cast %219 : vector<1x128xf32> to vector<1x128xf32>
    %221 = vector.broadcast %220 : vector<1x128xf32> to vector<16x128xf32>
    %222 = vector.extract_strided_slice %52 {offsets = [1, 0], sizes = [1, 128], strides = [1, 1]} : vector<4x128xf32> to vector<1x128xf32>
    %223 = vector.shape_cast %222 : vector<1x128xf32> to vector<1x128xf32>
    %224 = vector.broadcast %223 : vector<1x128xf32> to vector<16x128xf32>
    %225 = arith.mulf %26, %224 : vector<16x128xf32>
    %226 = arith.mulf %221, %215 : vector<16x128xf32>
    %227 = arith.mulf %225, %218 : vector<16x128xf32>
    %228 = arith.subf %226, %227 : vector<16x128xf32>
    %229 = arith.mulf %221, %218 : vector<16x128xf32>
    %230 = arith.mulf %225, %215 : vector<16x128xf32>
    %231 = arith.addf %229, %230 : vector<16x128xf32>
    %232 = vector.extract_strided_slice %51 {offsets = [2, 0], sizes = [1, 128], strides = [1, 1]} : vector<4x128xf32> to vector<1x128xf32>
    %233 = vector.shape_cast %232 : vector<1x128xf32> to vector<1x128xf32>
    %234 = vector.broadcast %233 : vector<1x128xf32> to vector<16x128xf32>
    %235 = vector.extract_strided_slice %52 {offsets = [2, 0], sizes = [1, 128], strides = [1, 1]} : vector<4x128xf32> to vector<1x128xf32>
    %236 = vector.shape_cast %235 : vector<1x128xf32> to vector<1x128xf32>
    %237 = vector.broadcast %236 : vector<1x128xf32> to vector<16x128xf32>
    %238 = arith.mulf %37, %237 : vector<16x128xf32>
    %239 = arith.mulf %234, %228 : vector<16x128xf32>
    %240 = arith.mulf %238, %231 : vector<16x128xf32>
    %241 = arith.subf %239, %240 : vector<16x128xf32>
    %242 = arith.mulf %234, %231 : vector<16x128xf32>
    %243 = arith.mulf %238, %228 : vector<16x128xf32>
    %244 = arith.addf %242, %243 : vector<16x128xf32>
    %245 = vector.extract_strided_slice %51 {offsets = [3, 0], sizes = [1, 128], strides = [1, 1]} : vector<4x128xf32> to vector<1x128xf32>
    %246 = vector.shape_cast %245 : vector<1x128xf32> to vector<1x128xf32>
    %247 = vector.broadcast %246 : vector<1x128xf32> to vector<16x128xf32>
    %248 = vector.extract_strided_slice %52 {offsets = [3, 0], sizes = [1, 128], strides = [1, 1]} : vector<4x128xf32> to vector<1x128xf32>
    %249 = vector.shape_cast %248 : vector<1x128xf32> to vector<1x128xf32>
    %250 = vector.broadcast %249 : vector<1x128xf32> to vector<16x128xf32>
    %251 = arith.mulf %48, %250 : vector<16x128xf32>
    %252 = arith.mulf %247, %241 : vector<16x128xf32>
    %253 = arith.mulf %251, %244 : vector<16x128xf32>
    %254 = arith.subf %252, %253 : vector<16x128xf32>
    %255 = arith.mulf %247, %244 : vector<16x128xf32>
    %256 = arith.mulf %251, %241 : vector<16x128xf32>
    %257 = arith.addf %255, %256 : vector<16x128xf32>
    %258 = vector.extract_strided_slice %50 {offsets = [8, 0], sizes = [4, 128], strides = [1, 1]} : vector<16x128xf32> to vector<4x128xf32>
    %259 = vector.extract_strided_slice %50 {offsets = [12, 0], sizes = [4, 128], strides = [1, 1]} : vector<16x128xf32> to vector<4x128xf32>
    %260 = vector.extract_strided_slice %258 {offsets = [0, 0], sizes = [1, 128], strides = [1, 1]} : vector<4x128xf32> to vector<1x128xf32>
    %261 = vector.shape_cast %260 : vector<1x128xf32> to vector<1x128xf32>
    %262 = vector.broadcast %261 : vector<1x128xf32> to vector<16x128xf32>
    %263 = vector.extract_strided_slice %259 {offsets = [0, 0], sizes = [1, 128], strides = [1, 1]} : vector<4x128xf32> to vector<1x128xf32>
    %264 = vector.shape_cast %263 : vector<1x128xf32> to vector<1x128xf32>
    %265 = vector.broadcast %264 : vector<1x128xf32> to vector<16x128xf32>
    %266 = arith.mulf %15, %265 : vector<16x128xf32>
    %267 = arith.mulf %262, %4 : vector<16x128xf32>
    %c1_i32_51 = arith.constant 1 : i32
    %268 = tpu.dynamic_rotate %4 by %c1_i32_51 dim 0 : vector<16x128xf32>, i32 -> vector<16x128xf32>
    %c15_i32_52 = arith.constant 15 : i32
    %269 = tpu.dynamic_rotate %4 by %c15_i32_52 dim 0 : vector<16x128xf32>, i32 -> vector<16x128xf32>
    %270 = arith.select %10, %268, %269 : vector<16x128xi1>, vector<16x128xf32>
    %271 = arith.mulf %266, %270 : vector<16x128xf32>
    %272 = arith.addf %267, %271 : vector<16x128xf32>
    %273 = vector.extract_strided_slice %258 {offsets = [1, 0], sizes = [1, 128], strides = [1, 1]} : vector<4x128xf32> to vector<1x128xf32>
    %274 = vector.shape_cast %273 : vector<1x128xf32> to vector<1x128xf32>
    %275 = vector.broadcast %274 : vector<1x128xf32> to vector<16x128xf32>
    %276 = vector.extract_strided_slice %259 {offsets = [1, 0], sizes = [1, 128], strides = [1, 1]} : vector<4x128xf32> to vector<1x128xf32>
    %277 = vector.shape_cast %276 : vector<1x128xf32> to vector<1x128xf32>
    %278 = vector.broadcast %277 : vector<1x128xf32> to vector<16x128xf32>
    %279 = arith.mulf %26, %278 : vector<16x128xf32>
    %280 = arith.mulf %275, %272 : vector<16x128xf32>
    %c2_i32_53 = arith.constant 2 : i32
    %281 = tpu.dynamic_rotate %272 by %c2_i32_53 dim 0 : vector<16x128xf32>, i32 -> vector<16x128xf32>
    %c14_i32_54 = arith.constant 14 : i32
    %282 = tpu.dynamic_rotate %272 by %c14_i32_54 dim 0 : vector<16x128xf32>, i32 -> vector<16x128xf32>
    %283 = arith.select %21, %281, %282 : vector<16x128xi1>, vector<16x128xf32>
    %284 = arith.mulf %279, %283 : vector<16x128xf32>
    %285 = arith.addf %280, %284 : vector<16x128xf32>
    %286 = vector.extract_strided_slice %258 {offsets = [2, 0], sizes = [1, 128], strides = [1, 1]} : vector<4x128xf32> to vector<1x128xf32>
    %287 = vector.shape_cast %286 : vector<1x128xf32> to vector<1x128xf32>
    %288 = vector.broadcast %287 : vector<1x128xf32> to vector<16x128xf32>
    %289 = vector.extract_strided_slice %259 {offsets = [2, 0], sizes = [1, 128], strides = [1, 1]} : vector<4x128xf32> to vector<1x128xf32>
    %290 = vector.shape_cast %289 : vector<1x128xf32> to vector<1x128xf32>
    %291 = vector.broadcast %290 : vector<1x128xf32> to vector<16x128xf32>
    %292 = arith.mulf %37, %291 : vector<16x128xf32>
    %293 = arith.mulf %288, %285 : vector<16x128xf32>
    %c4_i32_55 = arith.constant 4 : i32
    %294 = tpu.dynamic_rotate %285 by %c4_i32_55 dim 0 : vector<16x128xf32>, i32 -> vector<16x128xf32>
    %c12_i32_56 = arith.constant 12 : i32
    %295 = tpu.dynamic_rotate %285 by %c12_i32_56 dim 0 : vector<16x128xf32>, i32 -> vector<16x128xf32>
    %296 = arith.select %32, %294, %295 : vector<16x128xi1>, vector<16x128xf32>
    %297 = arith.mulf %292, %296 : vector<16x128xf32>
    %298 = arith.addf %293, %297 : vector<16x128xf32>
    %299 = vector.extract_strided_slice %258 {offsets = [3, 0], sizes = [1, 128], strides = [1, 1]} : vector<4x128xf32> to vector<1x128xf32>
    %300 = vector.shape_cast %299 : vector<1x128xf32> to vector<1x128xf32>
    %301 = vector.broadcast %300 : vector<1x128xf32> to vector<16x128xf32>
    %302 = vector.extract_strided_slice %259 {offsets = [3, 0], sizes = [1, 128], strides = [1, 1]} : vector<4x128xf32> to vector<1x128xf32>
    %303 = vector.shape_cast %302 : vector<1x128xf32> to vector<1x128xf32>
    %304 = vector.broadcast %303 : vector<1x128xf32> to vector<16x128xf32>
    %305 = arith.mulf %48, %304 : vector<16x128xf32>
    %306 = arith.mulf %301, %298 : vector<16x128xf32>
    %c8_i32_57 = arith.constant 8 : i32
    %307 = tpu.dynamic_rotate %298 by %c8_i32_57 dim 0 : vector<16x128xf32>, i32 -> vector<16x128xf32>
    %308 = arith.mulf %305, %307 : vector<16x128xf32>
    %309 = arith.addf %306, %308 : vector<16x128xf32>
    %c1_i32_58 = arith.constant 1 : i32
    %310 = tpu.dynamic_rotate %309 by %c1_i32_58 dim 0 : vector<16x128xf32>, i32 -> vector<16x128xf32>
    %c15_i32_59 = arith.constant 15 : i32
    %311 = tpu.dynamic_rotate %309 by %c15_i32_59 dim 0 : vector<16x128xf32>, i32 -> vector<16x128xf32>
    %312 = arith.select %10, %310, %311 : vector<16x128xi1>, vector<16x128xf32>
    %313 = arith.mulf %15, %309 : vector<16x128xf32>
    %314 = arith.subf %312, %313 : vector<16x128xf32>
    %cst_60 = arith.constant 0.707106769 : f32
    %315 = vector.broadcast %cst_60 : f32 to vector<16x128xf32>
    %316 = arith.mulf %315, %314 : vector<16x128xf32>
    %c2_i32_61 = arith.constant 2 : i32
    %317 = tpu.dynamic_rotate %316 by %c2_i32_61 dim 0 : vector<16x128xf32>, i32 -> vector<16x128xf32>
    %c14_i32_62 = arith.constant 14 : i32
    %318 = tpu.dynamic_rotate %316 by %c14_i32_62 dim 0 : vector<16x128xf32>, i32 -> vector<16x128xf32>
    %319 = arith.select %21, %317, %318 : vector<16x128xi1>, vector<16x128xf32>
    %320 = arith.mulf %26, %316 : vector<16x128xf32>
    %321 = arith.subf %319, %320 : vector<16x128xf32>
    %cst_63 = arith.constant 0.707106769 : f32
    %322 = vector.broadcast %cst_63 : f32 to vector<16x128xf32>
    %323 = arith.mulf %322, %321 : vector<16x128xf32>
    %c4_i32_64 = arith.constant 4 : i32
    %324 = tpu.dynamic_rotate %323 by %c4_i32_64 dim 0 : vector<16x128xf32>, i32 -> vector<16x128xf32>
    %c12_i32_65 = arith.constant 12 : i32
    %325 = tpu.dynamic_rotate %323 by %c12_i32_65 dim 0 : vector<16x128xf32>, i32 -> vector<16x128xf32>
    %326 = arith.select %32, %324, %325 : vector<16x128xi1>, vector<16x128xf32>
    %327 = arith.mulf %37, %323 : vector<16x128xf32>
    %328 = arith.subf %326, %327 : vector<16x128xf32>
    %cst_66 = arith.constant 0.707106769 : f32
    %329 = vector.broadcast %cst_66 : f32 to vector<16x128xf32>
    %330 = arith.mulf %329, %328 : vector<16x128xf32>
    %c8_i32_67 = arith.constant 8 : i32
    %331 = tpu.dynamic_rotate %330 by %c8_i32_67 dim 0 : vector<16x128xf32>, i32 -> vector<16x128xf32>
    %332 = arith.mulf %48, %330 : vector<16x128xf32>
    %333 = arith.subf %331, %332 : vector<16x128xf32>
    %cst_68 = arith.constant 0.707106769 : f32
    %334 = vector.broadcast %cst_68 : f32 to vector<16x128xf32>
    %335 = arith.mulf %334, %333 : vector<16x128xf32>
    %c2_i32_69 = arith.constant 2 : i32
    %336 = tpu.dynamic_rotate %335 by %c2_i32_69 dim 0 : vector<16x128xf32>, i32 -> vector<16x128xf32>
    %c14_i32_70 = arith.constant 14 : i32
    %337 = tpu.dynamic_rotate %335 by %c14_i32_70 dim 0 : vector<16x128xf32>, i32 -> vector<16x128xf32>
    %338 = arith.select %21, %336, %337 : vector<16x128xi1>, vector<16x128xf32>
    %339 = arith.select %10, %338, %335 : vector<16x128xi1>, vector<16x128xf32>
    %c4_i32_71 = arith.constant 4 : i32
    %340 = tpu.dynamic_rotate %339 by %c4_i32_71 dim 0 : vector<16x128xf32>, i32 -> vector<16x128xf32>
    %c12_i32_72 = arith.constant 12 : i32
    %341 = tpu.dynamic_rotate %339 by %c12_i32_72 dim 0 : vector<16x128xf32>, i32 -> vector<16x128xf32>
    %342 = arith.select %32, %340, %341 : vector<16x128xi1>, vector<16x128xf32>
    %343 = arith.select %21, %342, %339 : vector<16x128xi1>, vector<16x128xf32>
    %c8_i32_73 = arith.constant 8 : i32
    %344 = tpu.dynamic_rotate %343 by %c8_i32_73 dim 0 : vector<16x128xf32>, i32 -> vector<16x128xf32>
    %345 = arith.select %32, %344, %343 : vector<16x128xi1>, vector<16x128xf32>
    %c1_i32_74 = arith.constant 1 : i32
    %346 = tpu.dynamic_rotate %345 by %c1_i32_74 dim 0 : vector<16x128xf32>, i32 -> vector<16x128xf32>
    %c15_i32_75 = arith.constant 15 : i32
    %347 = tpu.dynamic_rotate %345 by %c15_i32_75 dim 0 : vector<16x128xf32>, i32 -> vector<16x128xf32>
    %348 = arith.select %10, %346, %347 : vector<16x128xi1>, vector<16x128xf32>
    %349 = arith.select %43, %348, %345 : vector<16x128xi1>, vector<16x128xf32>
    %350 = vector.extract_strided_slice %258 {offsets = [0, 0], sizes = [1, 128], strides = [1, 1]} : vector<4x128xf32> to vector<1x128xf32>
    %351 = vector.shape_cast %350 : vector<1x128xf32> to vector<1x128xf32>
    %352 = vector.broadcast %351 : vector<1x128xf32> to vector<16x128xf32>
    %353 = vector.extract_strided_slice %259 {offsets = [0, 0], sizes = [1, 128], strides = [1, 1]} : vector<4x128xf32> to vector<1x128xf32>
    %354 = vector.shape_cast %353 : vector<1x128xf32> to vector<1x128xf32>
    %355 = vector.broadcast %354 : vector<1x128xf32> to vector<16x128xf32>
    %c1_i32_76 = arith.constant 1 : i32
    %356 = tpu.dynamic_rotate %349 by %c1_i32_76 dim 0 : vector<16x128xf32>, i32 -> vector<16x128xf32>
    %c15_i32_77 = arith.constant 15 : i32
    %357 = tpu.dynamic_rotate %349 by %c15_i32_77 dim 0 : vector<16x128xf32>, i32 -> vector<16x128xf32>
    %358 = arith.select %10, %356, %357 : vector<16x128xi1>, vector<16x128xf32>
    %359 = arith.mulf %352, %349 : vector<16x128xf32>
    %cst_78 = arith.constant 0.000000e+00 : f32
    %360 = vector.broadcast %cst_78 : f32 to vector<16x128xf32>
    %361 = arith.subf %360, %355 : vector<16x128xf32>
    %362 = arith.mulf %361, %358 : vector<16x128xf32>
    %363 = vector.extract_strided_slice %258 {offsets = [1, 0], sizes = [1, 128], strides = [1, 1]} : vector<4x128xf32> to vector<1x128xf32>
    %364 = vector.shape_cast %363 : vector<1x128xf32> to vector<1x128xf32>
    %365 = vector.broadcast %364 : vector<1x128xf32> to vector<16x128xf32>
    %366 = vector.extract_strided_slice %259 {offsets = [1, 0], sizes = [1, 128], strides = [1, 1]} : vector<4x128xf32> to vector<1x128xf32>
    %367 = vector.shape_cast %366 : vector<1x128xf32> to vector<1x128xf32>
    %368 = vector.broadcast %367 : vector<1x128xf32> to vector<16x128xf32>
    %c2_i32_79 = arith.constant 2 : i32
    %369 = tpu.dynamic_rotate %359 by %c2_i32_79 dim 0 : vector<16x128xf32>, i32 -> vector<16x128xf32>
    %c14_i32_80 = arith.constant 14 : i32
    %370 = tpu.dynamic_rotate %359 by %c14_i32_80 dim 0 : vector<16x128xf32>, i32 -> vector<16x128xf32>
    %371 = arith.select %21, %369, %370 : vector<16x128xi1>, vector<16x128xf32>
    %c2_i32_81 = arith.constant 2 : i32
    %372 = tpu.dynamic_rotate %362 by %c2_i32_81 dim 0 : vector<16x128xf32>, i32 -> vector<16x128xf32>
    %c14_i32_82 = arith.constant 14 : i32
    %373 = tpu.dynamic_rotate %362 by %c14_i32_82 dim 0 : vector<16x128xf32>, i32 -> vector<16x128xf32>
    %374 = arith.select %21, %372, %373 : vector<16x128xi1>, vector<16x128xf32>
    %375 = arith.mulf %365, %359 : vector<16x128xf32>
    %376 = arith.mulf %368, %374 : vector<16x128xf32>
    %377 = arith.addf %375, %376 : vector<16x128xf32>
    %378 = arith.mulf %365, %362 : vector<16x128xf32>
    %379 = arith.mulf %368, %371 : vector<16x128xf32>
    %380 = arith.subf %378, %379 : vector<16x128xf32>
    %381 = vector.extract_strided_slice %258 {offsets = [2, 0], sizes = [1, 128], strides = [1, 1]} : vector<4x128xf32> to vector<1x128xf32>
    %382 = vector.shape_cast %381 : vector<1x128xf32> to vector<1x128xf32>
    %383 = vector.broadcast %382 : vector<1x128xf32> to vector<16x128xf32>
    %384 = vector.extract_strided_slice %259 {offsets = [2, 0], sizes = [1, 128], strides = [1, 1]} : vector<4x128xf32> to vector<1x128xf32>
    %385 = vector.shape_cast %384 : vector<1x128xf32> to vector<1x128xf32>
    %386 = vector.broadcast %385 : vector<1x128xf32> to vector<16x128xf32>
    %c4_i32_83 = arith.constant 4 : i32
    %387 = tpu.dynamic_rotate %377 by %c4_i32_83 dim 0 : vector<16x128xf32>, i32 -> vector<16x128xf32>
    %c12_i32_84 = arith.constant 12 : i32
    %388 = tpu.dynamic_rotate %377 by %c12_i32_84 dim 0 : vector<16x128xf32>, i32 -> vector<16x128xf32>
    %389 = arith.select %32, %387, %388 : vector<16x128xi1>, vector<16x128xf32>
    %c4_i32_85 = arith.constant 4 : i32
    %390 = tpu.dynamic_rotate %380 by %c4_i32_85 dim 0 : vector<16x128xf32>, i32 -> vector<16x128xf32>
    %c12_i32_86 = arith.constant 12 : i32
    %391 = tpu.dynamic_rotate %380 by %c12_i32_86 dim 0 : vector<16x128xf32>, i32 -> vector<16x128xf32>
    %392 = arith.select %32, %390, %391 : vector<16x128xi1>, vector<16x128xf32>
    %393 = arith.mulf %383, %377 : vector<16x128xf32>
    %394 = arith.mulf %386, %392 : vector<16x128xf32>
    %395 = arith.addf %393, %394 : vector<16x128xf32>
    %396 = arith.mulf %383, %380 : vector<16x128xf32>
    %397 = arith.mulf %386, %389 : vector<16x128xf32>
    %398 = arith.subf %396, %397 : vector<16x128xf32>
    %399 = vector.extract_strided_slice %258 {offsets = [3, 0], sizes = [1, 128], strides = [1, 1]} : vector<4x128xf32> to vector<1x128xf32>
    %400 = vector.shape_cast %399 : vector<1x128xf32> to vector<1x128xf32>
    %401 = vector.broadcast %400 : vector<1x128xf32> to vector<16x128xf32>
    %402 = vector.extract_strided_slice %259 {offsets = [3, 0], sizes = [1, 128], strides = [1, 1]} : vector<4x128xf32> to vector<1x128xf32>
    %403 = vector.shape_cast %402 : vector<1x128xf32> to vector<1x128xf32>
    %404 = vector.broadcast %403 : vector<1x128xf32> to vector<16x128xf32>
    %c8_i32_87 = arith.constant 8 : i32
    %405 = tpu.dynamic_rotate %395 by %c8_i32_87 dim 0 : vector<16x128xf32>, i32 -> vector<16x128xf32>
    %c8_i32_88 = arith.constant 8 : i32
    %406 = tpu.dynamic_rotate %398 by %c8_i32_88 dim 0 : vector<16x128xf32>, i32 -> vector<16x128xf32>
    %407 = arith.mulf %401, %395 : vector<16x128xf32>
    %408 = arith.mulf %404, %406 : vector<16x128xf32>
    %409 = arith.addf %407, %408 : vector<16x128xf32>
    %410 = arith.mulf %401, %398 : vector<16x128xf32>
    %411 = arith.mulf %404, %405 : vector<16x128xf32>
    %412 = arith.subf %410, %411 : vector<16x128xf32>
    %413 = vector.extract_strided_slice %258 {offsets = [0, 0], sizes = [1, 128], strides = [1, 1]} : vector<4x128xf32> to vector<1x128xf32>
    %414 = vector.shape_cast %413 : vector<1x128xf32> to vector<1x128xf32>
    %415 = vector.broadcast %414 : vector<1x128xf32> to vector<16x128xf32>
    %416 = vector.extract_strided_slice %259 {offsets = [0, 0], sizes = [1, 128], strides = [1, 1]} : vector<4x128xf32> to vector<1x128xf32>
    %417 = vector.shape_cast %416 : vector<1x128xf32> to vector<1x128xf32>
    %418 = vector.broadcast %417 : vector<1x128xf32> to vector<16x128xf32>
    %419 = arith.mulf %15, %418 : vector<16x128xf32>
    %420 = arith.mulf %415, %409 : vector<16x128xf32>
    %421 = arith.mulf %419, %412 : vector<16x128xf32>
    %422 = arith.subf %420, %421 : vector<16x128xf32>
    %423 = arith.mulf %415, %412 : vector<16x128xf32>
    %424 = arith.mulf %419, %409 : vector<16x128xf32>
    %425 = arith.addf %423, %424 : vector<16x128xf32>
    %426 = vector.extract_strided_slice %258 {offsets = [1, 0], sizes = [1, 128], strides = [1, 1]} : vector<4x128xf32> to vector<1x128xf32>
    %427 = vector.shape_cast %426 : vector<1x128xf32> to vector<1x128xf32>
    %428 = vector.broadcast %427 : vector<1x128xf32> to vector<16x128xf32>
    %429 = vector.extract_strided_slice %259 {offsets = [1, 0], sizes = [1, 128], strides = [1, 1]} : vector<4x128xf32> to vector<1x128xf32>
    %430 = vector.shape_cast %429 : vector<1x128xf32> to vector<1x128xf32>
    %431 = vector.broadcast %430 : vector<1x128xf32> to vector<16x128xf32>
    %432 = arith.mulf %26, %431 : vector<16x128xf32>
    %433 = arith.mulf %428, %422 : vector<16x128xf32>
    %434 = arith.mulf %432, %425 : vector<16x128xf32>
    %435 = arith.subf %433, %434 : vector<16x128xf32>
    %436 = arith.mulf %428, %425 : vector<16x128xf32>
    %437 = arith.mulf %432, %422 : vector<16x128xf32>
    %438 = arith.addf %436, %437 : vector<16x128xf32>
    %439 = vector.extract_strided_slice %258 {offsets = [2, 0], sizes = [1, 128], strides = [1, 1]} : vector<4x128xf32> to vector<1x128xf32>
    %440 = vector.shape_cast %439 : vector<1x128xf32> to vector<1x128xf32>
    %441 = vector.broadcast %440 : vector<1x128xf32> to vector<16x128xf32>
    %442 = vector.extract_strided_slice %259 {offsets = [2, 0], sizes = [1, 128], strides = [1, 1]} : vector<4x128xf32> to vector<1x128xf32>
    %443 = vector.shape_cast %442 : vector<1x128xf32> to vector<1x128xf32>
    %444 = vector.broadcast %443 : vector<1x128xf32> to vector<16x128xf32>
    %445 = arith.mulf %37, %444 : vector<16x128xf32>
    %446 = arith.mulf %441, %435 : vector<16x128xf32>
    %447 = arith.mulf %445, %438 : vector<16x128xf32>
    %448 = arith.subf %446, %447 : vector<16x128xf32>
    %449 = arith.mulf %441, %438 : vector<16x128xf32>
    %450 = arith.mulf %445, %435 : vector<16x128xf32>
    %451 = arith.addf %449, %450 : vector<16x128xf32>
    %452 = vector.extract_strided_slice %258 {offsets = [3, 0], sizes = [1, 128], strides = [1, 1]} : vector<4x128xf32> to vector<1x128xf32>
    %453 = vector.shape_cast %452 : vector<1x128xf32> to vector<1x128xf32>
    %454 = vector.broadcast %453 : vector<1x128xf32> to vector<16x128xf32>
    %455 = vector.extract_strided_slice %259 {offsets = [3, 0], sizes = [1, 128], strides = [1, 1]} : vector<4x128xf32> to vector<1x128xf32>
    %456 = vector.shape_cast %455 : vector<1x128xf32> to vector<1x128xf32>
    %457 = vector.broadcast %456 : vector<1x128xf32> to vector<16x128xf32>
    %458 = arith.mulf %48, %457 : vector<16x128xf32>
    %459 = arith.mulf %454, %448 : vector<16x128xf32>
    %460 = arith.mulf %458, %451 : vector<16x128xf32>
    %461 = arith.subf %459, %460 : vector<16x128xf32>
    %462 = arith.mulf %454, %451 : vector<16x128xf32>
    %463 = arith.mulf %458, %448 : vector<16x128xf32>
    %464 = arith.addf %462, %463 : vector<16x128xf32>
    %465 = arith.mulf %461, %254 : vector<16x128xf32>
    %466 = arith.mulf %464, %257 : vector<16x128xf32>
    %467 = arith.addf %465, %466 : vector<16x128xf32>
    %cst_89 = arith.constant dense<0.000000e+00> : vector<128xf32>
    %468 = vector.multi_reduction <add>, %467, %cst_89 [0] : vector<16x128xf32> to vector<128xf32>
    %469 = vector.shape_cast %468 : vector<128xf32> to vector<1x128xf32>
    %470 = arith.mulf %461, %257 : vector<16x128xf32>
    %471 = arith.mulf %464, %254 : vector<16x128xf32>
    %472 = arith.subf %470, %471 : vector<16x128xf32>
    %cst_90 = arith.constant dense<0.000000e+00> : vector<128xf32>
    %473 = vector.multi_reduction <add>, %472, %cst_90 [0] : vector<16x128xf32> to vector<128xf32>
    %474 = vector.shape_cast %473 : vector<128xf32> to vector<1x128xf32>
    %475 = arith.mulf %469, %469 : vector<1x128xf32>
    %476 = arith.mulf %474, %474 : vector<1x128xf32>
    %477 = arith.addf %475, %476 : vector<1x128xf32>
    %c0_91 = arith.constant 0 : index
    %c0_92 = arith.constant 0 : index
    %c0_93 = arith.constant 0 : index
    %478 = vector.load %arg2[%c0_91, %c0_92, %c0_93] : memref<1x1x128xf32, #tpu.memory_space<vmem>>, vector<1x1x128xf32>
    %479 = vector.shape_cast %478 : vector<1x1x128xf32> to vector<1x128xf32>
    %480 = vector.shape_cast %477 : vector<1x128xf32> to vector<1x1x128xf32>
    tpu.vector_store %arg2[%c0_91, %c0_92, %c0_93], %480 {strides = array<i32>} : memref<1x1x128xf32, #tpu.memory_space<vmem>>, vector<1x1x128xf32>,
    return
  }
  func.func @transform_0(%arg0: i32) -> (i32, i32, i32) {
    %c0_i32 = arith.constant 0 : i32
    %c0_i32_0 = arith.constant 0 : i32
    %c0_i32_1 = arith.constant 0 : i32
    return %arg0, %c0_i32, %c0_i32_0 : i32, i32, i32
  }
  func.func @transform_1(%arg0: i32) -> (i32, i32, i32) {
    %c0_i32 = arith.constant 0 : i32
    %c0_i32_0 = arith.constant 0 : i32
    %c0_i32_1 = arith.constant 0 : i32
    return %arg0, %c0_i32, %c0_i32_0 : i32, i32, i32
  }
}

</mosaic_0001>

<llo_original>
// kernel: tpu_custom_call.1
$region0: #{tpu_custom_call.1}
  #allocation0 [shape = 'u32[]', space=smem, size = 0x4, offset = 0x4, fixed_abs, tag = 'smem constant byte address 0x4 - core index']
  #allocation1 [shape = 'u32[72,128]{1,0:T(1,128)}', space=vmem, size = 0x9000, scoped, tag = 'internal scratch']
  %s0 = inlined_call_operand.hbm [shape: f32[1,16,128], index: 0, kind: input, shape index: {}]
  %s1 = inlined_call_operand.hbm [shape: f32[1,1,128], index: 1, kind: output, shape index: {}]
  %s2 = sld [smem:[#allocation0]]
  $region18: #{tpu_custom_call.1} parent=0
    _
  %s4 = ssub.s32 1, %s2
  %s5 = scalar_select 0, %s4, %s2
  $region1: #{tpu_custom_call.1} parent=0
    #allocation2 [shape = 'u8[8192]{0}', space=vmem, size = 0x2000, scoped, tag = 'input window, operand 0, single buffered']
    #allocation3 [shape = 's32[1]{0}', space=sflag, size = 0x4, scoped, tag = 'scoped memory for tpu_custom_call.1']
    #allocation4 [shape = 's32[1]{0}', space=sflag, size = 0x4, scoped, tag = 'scoped memory for tpu_custom_call.1']
    #allocation5 [shape = 'u8[512]{0}', space=vmem, size = 0x400, scoped, tag = 'output window, operand 0, single buffered']
    %6 = vsyncpa [#allocation3], 0
    %7 = vsyncpa [#allocation4], 0
    // Predicated region
    $region2: #{tpu_custom_call.1} parent=1 // pred_check
      _
    $region3: #{tpu_custom_call.1} parent=1 // pred_check_branch
      %9 = sbr.rel (0) target = $region5
    $region4: #{tpu_custom_call.1} parent=1 // pred_region
      %11 = vsyncadd [#allocation3], 0
      %s12 = sshll.u32 %s0, 4
      %s13 = int_to_ptr.hbm [resolvable:$true] %s12
      %s14 = sshll.u32 [#allocation2], 4
      %s15 = int_to_ptr.vmem [resolvable:$true] %s14
      %20 = dma.hbm_to_vmem [thread:$0]  %s13, 256, %s15, [#allocation3], 128, 128, 8
    $region5: #{tpu_custom_call.1} parent=1 // pred_fallthru
      _
    // Predicated region
    $region6: #{tpu_custom_call.1} parent=1 // pred_check
      _
    $region7: #{tpu_custom_call.1} parent=1 // pred_check_branch
      %22 = sbr.rel (0) target = $region9
    $region8: #{tpu_custom_call.1} parent=1 // pred_region
      %24 = dma.done [#allocation3], 256
    $region9: #{tpu_custom_call.1} parent=1 // pred_fallthru
      _
    %v25 = vlaneseq
    %v26 = vshrl.u32 %v25, 7
    %v27 = vadd.s32 %v26, 8
    %vm28 = vcmp.eq.s32.totalorder %v26, 0
    %vm29 = vcmp.eq.s32.totalorder %v27, 0
    %v30 = vsel %vm28, 1, 0
    %v31 = vsel %vm29, 1, 0
    %v32 = vcvt.s32.f32 %v30
    %v33 = vcvt.s32.f32 %v31
    %v34 = vand.u32 %v26, 1
    %v35 = vand.u32 %v27, 1
    %vm36 = vcmp.eq.s32.totalorder %v34, 1
    %vm37 = vcmp.eq.s32.totalorder %v35, 1
    %v38 = vmul.u32 %v34, 2
    %v39 = vmul.u32 %v35, 2
    %v40 = vsub.s32 %v38, 1
    %v41 = vsub.s32 %v39, 1
    %v42 = vcvt.s32.f32 %v40
    %v43 = vcvt.s32.f32 %v41
    %v44 = vshra.s32 %v26, 1
    %v45 = vshra.s32 %v27, 1
    %v46 = vand.u32 %v44, 1
    %v47 = vand.u32 %v45, 1
    %vm48 = vcmp.eq.s32.totalorder %v46, 1
    %vm49 = vcmp.eq.s32.totalorder %v47, 1
    %v50 = vmul.u32 %v46, 2
    %v51 = vmul.u32 %v47, 2
    %v52 = vsub.s32 %v50, 1
    %v53 = vsub.s32 %v51, 1
    %v54 = vcvt.s32.f32 %v52
    %v55 = vcvt.s32.f32 %v53
    %v56 = vshra.s32 %v26, 2
    %v57 = vshra.s32 %v27, 2
    %v58 = vand.u32 %v56, 1
    %v59 = vand.u32 %v57, 1
    %vm60 = vcmp.eq.s32.totalorder %v58, 1
    %vm61 = vcmp.eq.s32.totalorder %v59, 1
    %v62 = vmul.u32 %v58, 2
    %v63 = vmul.u32 %v59, 2
    %v64 = vsub.s32 %v62, 1
    %v65 = vsub.s32 %v63, 1
    %v66 = vcvt.s32.f32 %v64
    %v67 = vcvt.s32.f32 %v65
    %v68 = vshra.s32 %v26, 3
    %v69 = vshra.s32 %v27, 3
    %v70 = vand.u32 %v68, 1
    %v71 = vand.u32 %v69, 1
    %vm72 = vcmp.eq.s32.totalorder %v70, 1
    %vm73 = vcmp.eq.s32.totalorder %v71, 1
    %v74 = vmul.u32 %v70, 2
    %v75 = vmul.u32 %v71, 2
    %v76 = vsub.s32 %v74, 1
    %v77 = vsub.s32 %v75, 1
    %v78 = vcvt.s32.f32 %v76
    %v79 = vcvt.s32.f32 %v77
    %v80 = vld [vmem:[#allocation2] sm:$0xff]
    %v81 = vld [vmem:[#allocation2 + $0x8] sm:$0xff]
    %v82 = vperm.slane %v80, 0
    %v83 = vperm.slane %v80, 4
    %v84 = vmul.f32 %v42, %v83
    %v85 = vmul.f32 %v43, %v83
    %v86 = vmul.f32 %v82, %v32
    %v87 = vmul.f32 %v82, %v33
    %v88 = vrot.slane %v32, 7
    %v89 = vrot.slane %v33, 7
    %vm90 = vcmp.lt.s32.totalorder %v26, 1
    %v91 = vsel %vm90, %v88, %v89
    %v92 = vsel %vm90, %v89, %v88
    %v93 = vrot.slane %v32, 1
    %v94 = vrot.slane %v33, 1
    %vm95 = vcmp.lt.s32.totalorder %v26, 7
    %v96 = vsel %vm95, %v93, %v94
    %v97 = vsel %vm95, %v94, %v93
    %v98 = vsel %vm36, %v92, %v96
    %v99 = vsel %vm37, %v91, %v97
    %v100 = vmul.f32 %v84, %v98
    %v101 = vmul.f32 %v85, %v99
    %v102 = vadd.f32 %v86, %v100
    %v103 = vadd.f32 %v87, %v101
    %v104 = vperm.slane %v80, 1
    %v105 = vperm.slane %v80, 5
    %v106 = vmul.f32 %v54, %v105
    %v107 = vmul.f32 %v55, %v105
    %v108 = vmul.f32 %v104, %v102
    %v109 = vmul.f32 %v104, %v103
    %v110 = vrot.slane %v102, 6
    %v111 = vrot.slane %v103, 6
    %vm112 = vcmp.lt.s32.totalorder %v26, 2
    %v113 = vsel %vm112, %v110, %v111
    %v114 = vsel %vm112, %v111, %v110
    %v115 = vrot.slane %v102, 2
    %v116 = vrot.slane %v103, 2
    %vm117 = vcmp.lt.s32.totalorder %v26, 6
    %v118 = vsel %vm117, %v115, %v116
    %v119 = vsel %vm117, %v116, %v115
    %v120 = vsel %vm48, %v114, %v118
    %v121 = vsel %vm49, %v113, %v119
    %v122 = vmul.f32 %v106, %v120
    %v123 = vmul.f32 %v107, %v121
    %v124 = vadd.f32 %v108, %v122
    %v125 = vadd.f32 %v109, %v123
    %v126 = vperm.slane %v80, 2
    %v127 = vperm.slane %v80, 6
    %v128 = vmul.f32 %v66, %v127
    %v129 = vmul.f32 %v67, %v127
    %v130 = vmul.f32 %v126, %v124
    %v131 = vmul.f32 %v126, %v125
    %v132 = vrot.slane %v124, 4
    %v133 = vrot.slane %v125, 4
    %vm134 = vcmp.lt.s32.totalorder %v26, 4
    %v135 = vsel %vm134, %v132, %v133
    %v136 = vsel %vm134, %v133, %v132
    %v137 = vsel %vm60, %v136, %v135
    %v138 = vsel %vm61, %v135, %v136
    %v139 = vmul.f32 %v128, %v137
    %v140 = vmul.f32 %v129, %v138
    %v141 = vadd.f32 %v130, %v139
    %v142 = vadd.f32 %v131, %v140
    %v143 = vperm.slane %v80, 3
    %v144 = vperm.slane %v80, 7
    %v145 = vmul.f32 %v78, %v144
    %v146 = vmul.f32 %v79, %v144
    %v147 = vmul.f32 %v143, %v141
    %v148 = vmul.f32 %v143, %v142
    %v149 = vmul.f32 %v145, %v142
    %v150 = vmul.f32 %v146, %v141
    %v151 = vadd.f32 %v147, %v149
    %v152 = vadd.f32 %v148, %v150
    %v153 = vrot.slane %v151, 7
    %v154 = vrot.slane %v152, 7
    %v155 = vsel %vm90, %v153, %v154
    %v156 = vsel %vm90, %v154, %v153
    %v157 = vrot.slane %v151, 1
    %v158 = vrot.slane %v152, 1
    %v159 = vsel %vm95, %v157, %v158
    %v160 = vsel %vm95, %v158, %v157
    %v161 = vsel %vm36, %v156, %v159
    %v162 = vsel %vm37, %v155, %v160
    %v163 = vmul.f32 %v42, %v151
    %v164 = vmul.f32 %v43, %v152
    %v165 = vsub.f32 %v161, %v163
    %v166 = vsub.f32 %v162, %v164
    %v167 = vmul.f32 %v165, 0.70710677
    %v168 = vmul.f32 %v166, 0.70710677
    %v169 = vrot.slane %v167, 6
    %v170 = vrot.slane %v168, 6
    %v171 = vsel %vm112, %v169, %v170
    %v172 = vsel %vm112, %v170, %v169
    %v173 = vrot.slane %v167, 2
    %v174 = vrot.slane %v168, 2
    %v175 = vsel %vm117, %v173, %v174
    %v176 = vsel %vm117, %v174, %v173
    %v177 = vsel %vm48, %v172, %v175
    %v178 = vsel %vm49, %v171, %v176
    %v179 = vmul.f32 %v54, %v167
    %v180 = vmul.f32 %v55, %v168
    %v181 = vsub.f32 %v177, %v179
    %v182 = vsub.f32 %v178, %v180
    %v183 = vmul.f32 %v181, 0.70710677
    %v184 = vmul.f32 %v182, 0.70710677
    %v185 = vrot.slane %v183, 4
    %v186 = vrot.slane %v184, 4
    %v187 = vsel %vm134, %v185, %v186
    %v188 = vsel %vm134, %v186, %v185
    %v189 = vsel %vm60, %v188, %v187
    %v190 = vsel %vm61, %v187, %v188
    %v191 = vmul.f32 %v66, %v183
    %v192 = vmul.f32 %v67, %v184
    %v193 = vsub.f32 %v189, %v191
    %v194 = vsub.f32 %v190, %v192
    %v195 = vmul.f32 %v193, 0.70710677
    %v196 = vmul.f32 %v194, 0.70710677
    %v197 = vmul.f32 %v78, %v195
    %v198 = vmul.f32 %v79, %v196
    %v199 = vsub.f32 %v196, %v197
    %v200 = vsub.f32 %v195, %v198
    %v201 = vmul.f32 %v199, 0.70710677
    %v202 = vmul.f32 %v200, 0.70710677
    %v203 = vrot.slane %v201, 6
    %v204 = vrot.slane %v202, 6
    %v205 = vsel %vm112, %v203, %v204
    %v206 = vsel %vm112, %v204, %v203
    %v207 = vrot.slane %v201, 2
    %v208 = vrot.slane %v202, 2
    %v209 = vsel %vm117, %v207, %v208
    %v210 = vsel %vm117, %v208, %v207
    %v211 = vsel %vm48, %v206, %v209
    %v212 = vsel %vm49, %v205, %v210
    %v213 = vsel %vm36, %v211, %v201
    %v214 = vsel %vm37, %v212, %v202
    %v215 = vrot.slane %v213, 4
    %v216 = vrot.slane %v214, 4
    %v217 = vsel %vm134, %v215, %v216
    %v218 = vsel %vm134, %v216, %v215
    %v219 = vsel %vm60, %v218, %v217
    %v220 = vsel %vm61, %v217, %v218
    %v221 = vsel %vm48, %v219, %v213
    %v222 = vsel %vm49, %v220, %v214
    %v223 = vsel %vm60, %v222, %v221
    %v224 = vsel %vm61, %v221, %v222
    %v225 = vrot.slane %v223, 7
    %v226 = vrot.slane %v224, 7
    %v227 = vsel %vm90, %v225, %v226
    %v228 = vsel %vm90, %v226, %v225
    %v229 = vrot.slane %v223, 1
    %v230 = vrot.slane %v224, 1
    %v231 = vsel %vm95, %v229, %v230
    %v232 = vsel %vm95, %v230, %v229
    %v233 = vsel %vm36, %v228, %v231
    %v234 = vsel %vm37, %v227, %v232
    %v235 = vsel %vm72, %v233, %v223
    %v236 = vsel %vm73, %v234, %v224
    %v237 = vrot.slane %v235, 7
    %v238 = vrot.slane %v236, 7
    %v239 = vsel %vm90, %v237, %v238
    %v240 = vsel %vm90, %v238, %v237
    %v241 = vrot.slane %v235, 1
    %v242 = vrot.slane %v236, 1
    %v243 = vsel %vm95, %v241, %v242
    %v244 = vsel %vm95, %v242, %v241
    %v245 = vsel %vm36, %v240, %v243
    %v246 = vsel %vm37, %v239, %v244
    %v247 = vmul.f32 %v82, %v235
    %v248 = vmul.f32 %v82, %v236
    %v249 = vsub.f32 0.0, %v83
    %v250 = vmul.f32 %v249, %v245
    %v251 = vmul.f32 %v249, %v246
    %v252 = vrot.slane %v247, 6
    %v253 = vrot.slane %v248, 6
    %v254 = vsel %vm112, %v252, %v253
    %v255 = vsel %vm112, %v253, %v252
    %v256 = vrot.slane %v247, 2
    %v257 = vrot.slane %v248, 2
    %v258 = vsel %vm117, %v256, %v257
    %v259 = vsel %vm117, %v257, %v256
    %v260 = vsel %vm48, %v255, %v258
    %v261 = vsel %vm49, %v254, %v259
    %v262 = vrot.slane %v250, 6
    %v263 = vrot.slane %v251, 6
    %v264 = vsel %vm112, %v262, %v263
    %v265 = vsel %vm112, %v263, %v262
    %v266 = vrot.slane %v250, 2
    %v267 = vrot.slane %v251, 2
    %v268 = vsel %vm117, %v266, %v267
    %v269 = vsel %vm117, %v267, %v266
    %v270 = vsel %vm48, %v265, %v268
    %v271 = vsel %vm49, %v264, %v269
    %v272 = vmul.f32 %v104, %v247
    %v273 = vmul.f32 %v104, %v248
    %v274 = vmul.f32 %v105, %v270
    %v275 = vmul.f32 %v105, %v271
    %v276 = vadd.f32 %v272, %v274
    %v277 = vadd.f32 %v273, %v275
    %v278 = vmul.f32 %v104, %v250
    %v279 = vmul.f32 %v104, %v251
    %v280 = vmul.f32 %v105, %v260
    %v281 = vmul.f32 %v105, %v261
    %v282 = vsub.f32 %v278, %v280
    %v283 = vsub.f32 %v279, %v281
    %v284 = vrot.slane %v276, 4
    %v285 = vrot.slane %v277, 4
    %v286 = vsel %vm134, %v284, %v285
    %v287 = vsel %vm134, %v285, %v284
    %v288 = vsel %vm60, %v287, %v286
    %v289 = vsel %vm61, %v286, %v287
    %v290 = vrot.slane %v282, 4
    %v291 = vrot.slane %v283, 4
    %v292 = vsel %vm134, %v290, %v291
    %v293 = vsel %vm134, %v291, %v290
    %v294 = vsel %vm60, %v293, %v292
    %v295 = vsel %vm61, %v292, %v293
    %v296 = vmul.f32 %v126, %v276
    %v297 = vmul.f32 %v126, %v277
    %v298 = vmul.f32 %v127, %v294
    %v299 = vmul.f32 %v127, %v295
    %v300 = vadd.f32 %v296, %v298
    %v301 = vadd.f32 %v297, %v299
    %v302 = vmul.f32 %v126, %v282
    %v303 = vmul.f32 %v126, %v283
    %v304 = vmul.f32 %v127, %v288
    %v305 = vmul.f32 %v127, %v289
    %v306 = vsub.f32 %v302, %v304
    %v307 = vsub.f32 %v303, %v305
    %v308 = vmul.f32 %v143, %v300
    %v309 = vmul.f32 %v143, %v301
    %v310 = vmul.f32 %v144, %v307
    %v311 = vmul.f32 %v144, %v306
    %v312 = vadd.f32 %v308, %v310
    %v313 = vadd.f32 %v309, %v311
    %v314 = vmul.f32 %v143, %v306
    %v315 = vmul.f32 %v143, %v307
    %v316 = vmul.f32 %v144, %v301
    %v317 = vmul.f32 %v144, %v300
    %v318 = vsub.f32 %v314, %v316
    %v319 = vsub.f32 %v315, %v317
    %v320 = vmul.f32 %v82, %v312
    %v321 = vmul.f32 %v82, %v313
    %v322 = vmul.f32 %v84, %v318
    %v323 = vmul.f32 %v85, %v319
    %v324 = vsub.f32 %v320, %v322
    %v325 = vsub.f32 %v321, %v323
    %v326 = vmul.f32 %v82, %v318
    %v327 = vmul.f32 %v82, %v319
    %v328 = vmul.f32 %v84, %v312
    %v329 = vmul.f32 %v85, %v313
    %v330 = vadd.f32 %v326, %v328
    %v331 = vadd.f32 %v327, %v329
    %v332 = vmul.f32 %v104, %v324
    %v333 = vmul.f32 %v104, %v325
    %v334 = vmul.f32 %v106, %v330
    %v335 = vmul.f32 %v107, %v331
    %v336 = vsub.f32 %v332, %v334
    %v337 = vsub.f32 %v333, %v335
    %v338 = vmul.f32 %v104, %v330
    %v339 = vmul.f32 %v104, %v331
    %v340 = vmul.f32 %v106, %v324
    %v341 = vmul.f32 %v107, %v325
    %v342 = vadd.f32 %v338, %v340
    %v343 = vadd.f32 %v339, %v341
    %v344 = vmul.f32 %v126, %v336
    %v345 = vmul.f32 %v126, %v337
    %v346 = vmul.f32 %v128, %v342
    %v347 = vmul.f32 %v129, %v343
    %v348 = vsub.f32 %v344, %v346
    %v349 = vsub.f32 %v345, %v347
    %v350 = vmul.f32 %v126, %v342
    %v351 = vmul.f32 %v126, %v343
    %v352 = vmul.f32 %v128, %v336
    %v353 = vmul.f32 %v129, %v337
    %v354 = vadd.f32 %v350, %v352
    %v355 = vadd.f32 %v351, %v353
    %v356 = vmul.f32 %v143, %v348
    %v357 = vmul.f32 %v143, %v349
    %v358 = vmul.f32 %v145, %v354
    %v359 = vmul.f32 %v146, %v355
    %v360 = vsub.f32 %v356, %v358
    %v361 = vsub.f32 %v357, %v359
    %v362 = vmul.f32 %v143, %v354
    %v363 = vmul.f32 %v143, %v355
    %v364 = vmul.f32 %v145, %v348
    %v365 = vmul.f32 %v146, %v349
    %v366 = vadd.f32 %v362, %v364
    %v367 = vadd.f32 %v363, %v365
    %v368 = vperm.slane %v81, 0
    %v369 = vperm.slane %v81, 4
    %v370 = vmul.f32 %v42, %v369
    %v371 = vmul.f32 %v43, %v369
    %v372 = vmul.f32 %v368, %v32
    %v373 = vmul.f32 %v368, %v33
    %v374 = vmul.f32 %v370, %v98
    %v375 = vmul.f32 %v371, %v99
    %v376 = vadd.f32 %v372, %v374
    %v377 = vadd.f32 %v373, %v375
    %v378 = vperm.slane %v81, 1
    %v379 = vperm.slane %v81, 5
    %v380 = vmul.f32 %v54, %v379
    %v381 = vmul.f32 %v55, %v379
    %v382 = vmul.f32 %v378, %v376
    %v383 = vmul.f32 %v378, %v377
    %v384 = vrot.slane %v376, 6
    %v385 = vrot.slane %v377, 6
    %v386 = vsel %vm112, %v384, %v385
    %v387 = vsel %vm112, %v385, %v384
    %v388 = vrot.slane %v376, 2
    %v389 = vrot.slane %v377, 2
    %v390 = vsel %vm117, %v388, %v389
    %v391 = vsel %vm117, %v389, %v388
    %v392 = vsel %vm48, %v387, %v390
    %v393 = vsel %vm49, %v386, %v391
    %v394 = vmul.f32 %v380, %v392
    %v395 = vmul.f32 %v381, %v393
    %v396 = vadd.f32 %v382, %v394
    %v397 = vadd.f32 %v383, %v395
    %v398 = vperm.slane %v81, 2
    %v399 = vperm.slane %v81, 6
    %v400 = vmul.f32 %v66, %v399
    %v401 = vmul.f32 %v67, %v399
    %v402 = vmul.f32 %v398, %v396
    %v403 = vmul.f32 %v398, %v397
    %v404 = vrot.slane %v396, 4
    %v405 = vrot.slane %v397, 4
    %v406 = vsel %vm134, %v404, %v405
    %v407 = vsel %vm134, %v405, %v404
    %v408 = vsel %vm60, %v407, %v406
    %v409 = vsel %vm61, %v406, %v407
    %v410 = vmul.f32 %v400, %v408
    %v411 = vmul.f32 %v401, %v409
    %v412 = vadd.f32 %v402, %v410
    %v413 = vadd.f32 %v403, %v411
    %v414 = vperm.slane %v81, 3
    %v415 = vperm.slane %v81, 7
    %v416 = vmul.f32 %v78, %v415
    %v417 = vmul.f32 %v79, %v415
    %v418 = vmul.f32 %v414, %v412
    %v419 = vmul.f32 %v414, %v413
    %v420 = vmul.f32 %v416, %v413
    %v421 = vmul.f32 %v417, %v412
    %v422 = vadd.f32 %v418, %v420
    %v423 = vadd.f32 %v419, %v421
    %v424 = vrot.slane %v422, 7
    %v425 = vrot.slane %v423, 7
    %v426 = vsel %vm90, %v424, %v425
    %v427 = vsel %vm90, %v425, %v424
    %v428 = vrot.slane %v422, 1
    %v429 = vrot.slane %v423, 1
    %v430 = vsel %vm95, %v428, %v429
    %v431 = vsel %vm95, %v429, %v428
    %v432 = vsel %vm36, %v427, %v430
    %v433 = vsel %vm37, %v426, %v431
    %v434 = vmul.f32 %v42, %v422
    %v435 = vmul.f32 %v43, %v423
    %v436 = vsub.f32 %v432, %v434
    %v437 = vsub.f32 %v433, %v435
    %v438 = vmul.f32 %v436, 0.70710677
    %v439 = vmul.f32 %v437, 0.70710677
    %v440 = vrot.slane %v438, 6
    %v441 = vrot.slane %v439, 6
    %v442 = vsel %vm112, %v440, %v441
    %v443 = vsel %vm112, %v441, %v440
    %v444 = vrot.slane %v438, 2
    %v445 = vrot.slane %v439, 2
    %v446 = vsel %vm117, %v444, %v445
    %v447 = vsel %vm117, %v445, %v444
    %v448 = vsel %vm48, %v443, %v446
    %v449 = vsel %vm49, %v442, %v447
    %v450 = vmul.f32 %v54, %v438
    %v451 = vmul.f32 %v55, %v439
    %v452 = vsub.f32 %v448, %v450
    %v453 = vsub.f32 %v449, %v451
    %v454 = vmul.f32 %v452, 0.70710677
    %v455 = vmul.f32 %v453, 0.70710677
    %v456 = vrot.slane %v454, 4
    %v457 = vrot.slane %v455, 4
    %v458 = vsel %vm134, %v456, %v457
    %v459 = vsel %vm134, %v457, %v456
    %v460 = vsel %vm60, %v459, %v458
    %v461 = vsel %vm61, %v458, %v459
    %v462 = vmul.f32 %v66, %v454
    %v463 = vmul.f32 %v67, %v455
    %v464 = vsub.f32 %v460, %v462
    %v465 = vsub.f32 %v461, %v463
    %v466 = vmul.f32 %v464, 0.70710677
    %v467 = vmul.f32 %v465, 0.70710677
    %v468 = vmul.f32 %v78, %v466
    %v469 = vmul.f32 %v79, %v467
    %v470 = vsub.f32 %v467, %v468
    %v471 = vsub.f32 %v466, %v469
    %v472 = vmul.f32 %v470, 0.70710677
    %v473 = vmul.f32 %v471, 0.70710677
    %v474 = vrot.slane %v472, 6
    %v475 = vrot.slane %v473, 6
    %v476 = vsel %vm112, %v474, %v475
    %v477 = vsel %vm112, %v475, %v474
    %v478 = vrot.slane %v472, 2
    %v479 = vrot.slane %v473, 2
    %v480 = vsel %vm117, %v478, %v479
    %v481 = vsel %vm117, %v479, %v478
    %v482 = vsel %vm48, %v477, %v480
    %v483 = vsel %vm49, %v476, %v481
    %v484 = vsel %vm36, %v482, %v472
    %v485 = vsel %vm37, %v483, %v473
    %v486 = vrot.slane %v484, 4
    %v487 = vrot.slane %v485, 4
    %v488 = vsel %vm134, %v486, %v487
    %v489 = vsel %vm134, %v487, %v486
    %v490 = vsel %vm60, %v489, %v488
    %v491 = vsel %vm61, %v488, %v489
    %v492 = vsel %vm48, %v490, %v484
    %v493 = vsel %vm49, %v491, %v485
    %v494 = vsel %vm60, %v493, %v492
    %v495 = vsel %vm61, %v492, %v493
    %v496 = vrot.slane %v494, 7
    %v497 = vrot.slane %v495, 7
    %v498 = vsel %vm90, %v496, %v497
    %v499 = vsel %vm90, %v497, %v496
    %v500 = vrot.slane %v494, 1
    %v501 = vrot.slane %v495, 1
    %v502 = vsel %vm95, %v500, %v501
    %v503 = vsel %vm95, %v501, %v500
    %v504 = vsel %vm36, %v499, %v502
    %v505 = vsel %vm37, %v498, %v503
    %v506 = vsel %vm72, %v504, %v494
    %v507 = vsel %vm73, %v505, %v495
    %v508 = vrot.slane %v506, 7
    %v509 = vrot.slane %v507, 7
    %v510 = vsel %vm90, %v508, %v509
    %v511 = vsel %vm90, %v509, %v508
    %v512 = vrot.slane %v506, 1
    %v513 = vrot.slane %v507, 1
    %v514 = vsel %vm95, %v512, %v513
    %v515 = vsel %vm95, %v513, %v512
    %v516 = vsel %vm36, %v511, %v514
    %v517 = vsel %vm37, %v510, %v515
    %v518 = vmul.f32 %v368, %v506
    %v519 = vmul.f32 %v368, %v507
    %v520 = vsub.f32 0.0, %v369
    %v521 = vmul.f32 %v520, %v516
    %v522 = vmul.f32 %v520, %v517
    %v523 = vrot.slane %v518, 6
    %v524 = vrot.slane %v519, 6
    %v525 = vsel %vm112, %v523, %v524
    %v526 = vsel %vm112, %v524, %v523
    %v527 = vrot.slane %v518, 2
    %v528 = vrot.slane %v519, 2
    %v529 = vsel %vm117, %v527, %v528
    %v530 = vsel %vm117, %v528, %v527
    %v531 = vsel %vm48, %v526, %v529
    %v532 = vsel %vm49, %v525, %v530
    %v533 = vrot.slane %v521, 6
    %v534 = vrot.slane %v522, 6
    %v535 = vsel %vm112, %v533, %v534
    %v536 = vsel %vm112, %v534, %v533
    %v537 = vrot.slane %v521, 2
    %v538 = vrot.slane %v522, 2
    %v539 = vsel %vm117, %v537, %v538
    %v540 = vsel %vm117, %v538, %v537
    %v541 = vsel %vm48, %v536, %v539
    %v542 = vsel %vm49, %v535, %v540
    %v543 = vmul.f32 %v378, %v518
    %v544 = vmul.f32 %v378, %v519
    %v545 = vmul.f32 %v379, %v541
    %v546 = vmul.f32 %v379, %v542
    %v547 = vadd.f32 %v543, %v545
    %v548 = vadd.f32 %v544, %v546
    %v549 = vmul.f32 %v378, %v521
    %v550 = vmul.f32 %v378, %v522
    %v551 = vmul.f32 %v379, %v531
    %v552 = vmul.f32 %v379, %v532
    %v553 = vsub.f32 %v549, %v551
    %v554 = vsub.f32 %v550, %v552
    %v555 = vrot.slane %v547, 4
    %v556 = vrot.slane %v548, 4
    %v557 = vsel %vm134, %v555, %v556
    %v558 = vsel %vm134, %v556, %v555
    %v559 = vsel %vm60, %v558, %v557
    %v560 = vsel %vm61, %v557, %v558
    %v561 = vrot.slane %v553, 4
    %v562 = vrot.slane %v554, 4
    %v563 = vsel %vm134, %v561, %v562
    %v564 = vsel %vm134, %v562, %v561
    %v565 = vsel %vm60, %v564, %v563
    %v566 = vsel %vm61, %v563, %v564
    %v567 = vmul.f32 %v398, %v547
    %v568 = vmul.f32 %v398, %v548
    %v569 = vmul.f32 %v399, %v565
    %v570 = vmul.f32 %v399, %v566
    %v571 = vadd.f32 %v567, %v569
    %v572 = vadd.f32 %v568, %v570
    %v573 = vmul.f32 %v398, %v553
    %v574 = vmul.f32 %v398, %v554
    %v575 = vmul.f32 %v399, %v559
    %v576 = vmul.f32 %v399, %v560
    %v577 = vsub.f32 %v573, %v575
    %v578 = vsub.f32 %v574, %v576
    %v579 = vmul.f32 %v414, %v571
    %v580 = vmul.f32 %v414, %v572
    %v581 = vmul.f32 %v415, %v578
    %v582 = vmul.f32 %v415, %v577
    %v583 = vadd.f32 %v579, %v581
    %v584 = vadd.f32 %v580, %v582
    %v585 = vmul.f32 %v414, %v577
    %v586 = vmul.f32 %v414, %v578
    %v587 = vmul.f32 %v415, %v572
    %v588 = vmul.f32 %v415, %v571
    %v589 = vsub.f32 %v585, %v587
    %v590 = vsub.f32 %v586, %v588
    %v591 = vmul.f32 %v368, %v583
    %v592 = vmul.f32 %v368, %v584
    %v593 = vmul.f32 %v370, %v589
    %v594 = vmul.f32 %v371, %v590
    %v595 = vsub.f32 %v591, %v593
    %v596 = vsub.f32 %v592, %v594
    %v597 = vmul.f32 %v368, %v589
    %v598 = vmul.f32 %v368, %v590
    %v599 = vmul.f32 %v370, %v583
    %v600 = vmul.f32 %v371, %v584
    %v601 = vadd.f32 %v597, %v599
    %v602 = vadd.f32 %v598, %v600
    %v603 = vmul.f32 %v378, %v595
    %v604 = vmul.f32 %v378, %v596
    %v605 = vmul.f32 %v380, %v601
    %v606 = vmul.f32 %v381, %v602
    %v607 = vsub.f32 %v603, %v605
    %v608 = vsub.f32 %v604, %v606
    %v609 = vmul.f32 %v378, %v601
    %v610 = vmul.f32 %v378, %v602
    %v611 = vmul.f32 %v380, %v595
    %v612 = vmul.f32 %v381, %v596
    %v613 = vadd.f32 %v609, %v611
    %v614 = vadd.f32 %v610, %v612
    %v615 = vmul.f32 %v398, %v607
    %v616 = vmul.f32 %v398, %v608
    %v617 = vmul.f32 %v400, %v613
    %v618 = vmul.f32 %v401, %v614
    %v619 = vsub.f32 %v615, %v617
    %v620 = vsub.f32 %v616, %v618
    %v621 = vmul.f32 %v398, %v613
    %v622 = vmul.f32 %v398, %v614
    %v623 = vmul.f32 %v400, %v607
    %v624 = vmul.f32 %v401, %v608
    %v625 = vadd.f32 %v621, %v623
    %v626 = vadd.f32 %v622, %v624
    %v627 = vmul.f32 %v414, %v619
    %v628 = vmul.f32 %v414, %v620
    %v629 = vmul.f32 %v416, %v625
    %v630 = vmul.f32 %v417, %v626
    %v631 = vsub.f32 %v627, %v629
    %v632 = vsub.f32 %v628, %v630
    %v633 = vmul.f32 %v414, %v625
    %v634 = vmul.f32 %v414, %v626
    %v635 = vmul.f32 %v416, %v619
    %v636 = vmul.f32 %v417, %v620
    %v637 = vadd.f32 %v633, %v635
    %v638 = vadd.f32 %v634, %v636
    %v639 = vmul.f32 %v631, %v360
    %v640 = vmul.f32 %v632, %v361
    %v641 = vmul.f32 %v637, %v366
    %v642 = vmul.f32 %v638, %v367
    %v643 = vadd.f32 %v639, %v641
    %v644 = vadd.f32 %v640, %v642
    %v645 = vadd.f32 %v643, %v644
    %v646 = vrot.slane %v645, 4
    %v647 = vadd.f32 %v645, %v646
    %v648 = vrot.slane %v647, 2
    %v649 = vadd.f32 %v647, %v648
    %v650 = vrot.slane %v649, 1
    %v651 = vadd.f32 %v649, %v650
    %v652 = vmul.f32 %v631, %v366
    %v653 = vmul.f32 %v632, %v367
    %v654 = vmul.f32 %v637, %v360
    %v655 = vmul.f32 %v638, %v361
    %v656 = vsub.f32 %v652, %v654
    %v657 = vsub.f32 %v653, %v655
    %v658 = vadd.f32 %v656, %v657
    %v659 = vrot.slane %v658, 4
    %v660 = vadd.f32 %v658, %v659
    %v661 = vrot.slane %v660, 2
    %v662 = vadd.f32 %v660, %v661
    %v663 = vrot.slane %v662, 1
    %v664 = vadd.f32 %v662, %v663
    %v665 = vmul.f32 %v651, %v651
    %v666 = vmul.f32 %v664, %v664
    %v667 = vadd.f32 %v665, %v666
    %668 = vst [vmem:[#allocation5] sm:$0x1] %v667
    // Predicated region
    $region10: #{tpu_custom_call.1} parent=1 // pred_check
      _
    $region11: #{tpu_custom_call.1} parent=1 // pred_check_branch
      %670 = sbr.rel (0) target = $region13
    $region12: #{tpu_custom_call.1} parent=1 // pred_region
      %672 = vsyncadd [#allocation4], 0
      %s674 = sshll.u32 [#allocation5], 4
      %s675 = int_to_ptr.vmem [resolvable:$true] %s674
      %s676 = sshll.u32 %s1, 4
      %s677 = int_to_ptr.hbm [resolvable:$true] %s676
      %679 = dma.vmem_to_hbm [thread:$0]  %s675, 16, %s677, [#allocation4]
    $region13: #{tpu_custom_call.1} parent=1 // pred_fallthru
      _
    // Predicated region
    $region14: #{tpu_custom_call.1} parent=1 // pred_check
      _
    $region15: #{tpu_custom_call.1} parent=1 // pred_check_branch
      %681 = sbr.rel (0) target = $region17
    $region16: #{tpu_custom_call.1} parent=1 // pred_region
      %683 = dma.done [#allocation4], 16
    $region17: #{tpu_custom_call.1} parent=1 // pred_fallthru
      _
    %684 = vsyncpa [#allocation3], 1
    %685 = vsyncpa [#allocation4], 1

</llo_original>
